<compile_context>
chip_gen: v7x
topology: tpu7x:2x2x1
jax: 0.10.0
libtpu: 0.0.40
codegen_flags: <defaults>
</compile_context>

<pallas_src>
import functools
import math

import jax
import jax.numpy as jnp
from jax.experimental import pallas as pl
from jax.experimental.pallas import tpu as pltpu

EPS = 1e-5
LANE = 128


def _round_up(v, m):
    return (v + m - 1) // m * m


def _eca_kernel_size(channels, gamma=2, b=1):
    t = int(abs(math.log(channels) / math.log(2.0) + b) / gamma)
    return t if t % 2 else t + 1


def _bn_train(h, gamma, beta):
    """BatchNorm2d forward, training mode, on (rows, C): stats over rows."""
    mu = jnp.mean(h, axis=0, keepdims=True)
    var = jnp.mean(jnp.square(h - mu), axis=0, keepdims=True)   # biased variance
    return (h - mu) * (gamma * jax.lax.rsqrt(var + EPS)) + beta


def bottleneck_kernel(x_ref, w1_ref, g1_ref, b1_ref,
                      w2_ref, g2_ref, b2_ref,
                      w3_ref, g3_ref, b3_ref, band_ref,
                      o_ref, *, n_batch, height, width):
    hw = height * width
    rows = n_batch * hw
    cin_p = x_ref.shape[-1]
    p_p = w1_ref.shape[-1]
    cout_p = w3_ref.shape[-1]

    x3d = x_ref[...]                                       # (N, HW, Cin_p), lane-dense
    x2d = x3d.reshape(rows, cin_p)

    # ---- conv1 (1x1) + BN1 + ReLU --------------------------------------
    h = jnp.dot(x2d, w1_ref[...], preferred_element_type=jnp.float32)
    h = jnp.maximum(_bn_train(h, g1_ref[...], b1_ref[...]), 0.0)   # (rows, P_p)

    # ---- conv2 (3x3, pad=1, stride=1): im2col via row shifts, one fused matmul
    # Per-row spatial position (built from sublane iotas; no integer division).
    spos = jax.lax.broadcasted_iota(
        jnp.int32, (n_batch, hw, p_p), 1).reshape(rows, p_p)        # y*W + x
    xpos = jax.lax.broadcasted_iota(
        jnp.int32, (n_batch * height, width, p_p), 1).reshape(rows, p_p)  # x

    taps = []
    for kh in range(3):
        for kw in range(3):
            dy, dx = kh - 1, kw - 1
            d = dy * width + dx                            # flat row offset of source
            # shifted[r] = h[(r + d) % rows]; wrap-arounds get masked below.
            shifted = h if d == 0 else jnp.roll(h, -d, axis=0)
            conds = []
            if dy == -1:
                conds.append(spos >= width)                # y >= 1
            elif dy == 1:
                conds.append(spos < hw - width)            # y <= H-2
            if dx == -1:
                conds.append(xpos >= 1)                    # x >= 1
            elif dx == 1:
                conds.append(xpos < width - 1)             # x <= W-2
            if conds:
                m = conds[0]
                for c in conds[1:]:
                    m = jnp.logical_and(m, c)
                shifted = jnp.where(m, shifted, 0.0)       # zero padding at edges
            taps.append(shifted)
    im2col = jnp.concatenate(taps, axis=-1)                # (rows, 9*P_p), lane concat
    h2 = jnp.dot(im2col, w2_ref[...], preferred_element_type=jnp.float32)
    h2 = jnp.maximum(_bn_train(h2, g2_ref[...], b2_ref[...]), 0.0)

    # ---- conv3 (1x1) + BN3 ----------------------------------------------
    h3 = jnp.dot(h2, w3_ref[...], preferred_element_type=jnp.float32)
    h3 = _bn_train(h3, g3_ref[...], b3_ref[...])           # (rows, Cout_p)

    # ---- ECA gate (batched) + residual + ReLU -----------------------------
    h3_3d = h3.reshape(n_batch, hw, cout_p)
    pooled = jnp.mean(h3_3d, axis=1)                       # (N, Cout_p) global avg pool
    logits = jnp.dot(pooled, band_ref[...],
                     preferred_element_type=jnp.float32)   # k-tap 1D conv as band matmul
    gate = jax.nn.sigmoid(logits)                          # (N, Cout_p)

    o_ref[...] = jnp.maximum(h3_3d * gate[:, None, :] + x3d, 0.0)


def init_params(key, in_planes, planes):
    """PyTorch-layout parameters of a freshly constructed Bottleneck block."""
    expansion = 4
    cout = planes * expansion
    ks = jax.random.split(key, 8)
    p = {}
    p["w1"] = 0.1 * jax.random.normal(ks[0], (planes, in_planes, 1, 1), jnp.float32)
    p["w2"] = 0.1 * jax.random.normal(ks[1], (planes, planes, 3, 3), jnp.float32)
    p["w3"] = 0.1 * jax.random.normal(ks[2], (cout, planes, 1, 1), jnp.float32)
    p["g1"] = (1.0 + 0.1 * jax.random.normal(ks[3], (planes,))).astype(jnp.float32)
    p["b1"] = (0.1 * jax.random.normal(ks[4], (planes,))).astype(jnp.float32)
    p["g2"] = (1.0 + 0.05 * jax.random.normal(ks[5], (planes,))).astype(jnp.float32)
    p["b2"] = (0.05 * jax.random.normal(ks[6], (planes,))).astype(jnp.float32)
    p["g3"] = jnp.ones((cout,), jnp.float32)
    p["b3"] = jnp.zeros((cout,), jnp.float32)
    k = _eca_kernel_size(cout)                              # k = 3 for cout = 16
    p["eca_w"] = 0.5 * jax.random.normal(ks[7], (k,), jnp.float32)
    return p


def bottleneck_forward(x_nchw, params):
    N, Cin, H, W = x_nchw.shape
    HW = H * W
    P = params["w1"].shape[0]
    Cout = params["w3"].shape[0]
    assert Cin == Cout, "identity path requires in_planes == planes * expansion"
    assert (N * HW) % 8 == 0 and HW % 8 == 0

    cin_p = _round_up(Cin, LANE)
    p_p = _round_up(P, LANE)
    cout_p = _round_up(Cout, LANE)
    assert cin_p == cout_p

    # NCHW -> (N, HW, C) channels-last, zero-pad channels to 128 lanes.
    x = jnp.transpose(x_nchw, (0, 2, 3, 1)).reshape(N, HW, Cin).astype(jnp.float32)
    x = jnp.pad(x, ((0, 0), (0, 0), (0, cin_p - Cin)))

    # conv1 1x1 weight -> (Cin_p, P_p) matmul form.
    w1 = jnp.transpose(params["w1"][:, :, 0, 0])                       # (Cin, P)
    w1 = jnp.pad(w1, ((0, cin_p - Cin), (0, p_p - P)))

    # conv2 3x3 weight -> fused (9*P_p, P_p) im2col slab, tap order kh*3+kw.
    blocks = []
    for kh in range(3):
        for kw in range(3):
            blk = jnp.transpose(params["w2"][:, :, kh, kw])            # (in=P, out=P)
            blocks.append(jnp.pad(blk, ((0, p_p - P), (0, p_p - P))))
    w2_slab = jnp.concatenate(blocks, axis=0)                          # (9*P_p, P_p)

    # conv3 1x1 weight -> (P_p, Cout_p).
    w3 = jnp.transpose(params["w3"][:, :, 0, 0])                       # (P, Cout)
    w3 = jnp.pad(w3, ((0, p_p - P), (0, cout_p - Cout)))

    def pad_vec(v, n):
        return jnp.pad(v.astype(jnp.float32), (0, n - v.shape[0])).reshape(1, n)

    g1, b1 = pad_vec(params["g1"], p_p), pad_vec(params["b1"], p_p)
    g2, b2 = pad_vec(params["g2"], p_p), pad_vec(params["b2"], p_p)
    g3, b3 = pad_vec(params["g3"], cout_p), pad_vec(params["b3"], cout_p)

    # ECA k-tap 1D channel conv (zero-pad) as a (Cout_p, Cout_p) band matrix:
    #   logit[c] = sum_i w[i] * pooled[c + i - pad]  ==  pooled @ band.
    # Padded channels of `pooled` are zero, so zero-pad semantics are exact.
    eca_w = params["eca_w"].astype(jnp.float32)
    eca_k = int(eca_w.shape[0])
    pad = (eca_k - 1) // 2
    band = jnp.zeros((cout_p, cout_p), jnp.float32)
    for i in range(eca_k):
        band = band + eca_w[i] * jnp.eye(cout_p, cout_p, k=pad - i, dtype=jnp.float32)

    kernel = functools.partial(bottleneck_kernel, n_batch=N, height=H, width=W)
    vmem = pl.BlockSpec(memory_space=pltpu.MemorySpace.VMEM)

    rows = N * HW
    flops = 2 * rows * (cin_p * p_p + 9 * p_p * p_p + p_p * cout_p) \
        + 2 * N * cout_p * cout_p
    bytes_accessed = int(x.nbytes + w1.nbytes + w2_slab.nbytes + w3.nbytes
                         + band.nbytes + rows * cout_p * 4)
    cost = pl.CostEstimate(flops=int(flops),
                           transcendentals=int(N * cout_p + 3 * rows),
                           bytes_accessed=bytes_accessed)

    out = pl.pallas_call(
        kernel,
        out_shape=jax.ShapeDtypeStruct((N, HW, cout_p), jnp.float32),
        in_specs=[vmem] * 11,
        out_specs=vmem,
        compiler_params=pltpu.CompilerParams(vmem_limit_bytes=64 * 1024 * 1024),
        cost_estimate=cost,
    )(x, w1, g1, b1, w2_slab, g2, b2, w3, g3, b3, band)

    # strip channel padding, back to NCHW
    out = out[:, :, :Cout].reshape(N, H, W, Cout)
    return jnp.transpose(out, (0, 3, 1, 2))


if __name__ == "__main__":
    # Bottleneck(in_planes=16, planes=4, stride=1, downsample=None):
    # identity add requires in_planes == planes * 4.
    N, in_planes, planes, H, W = 2, 16, 4, 8, 8
    key = jax.random.PRNGKey(0)
    kx, kp = jax.random.split(key)
    x = jax.random.normal(kx, (N, in_planes, H, W), jnp.float32)
    params = init_params(kp, in_planes, planes)

    out = bottleneck_forward(x, params)
    out = jax.block_until_ready(out)
    assert out.shape == (N, planes * 4, H, W)
    assert bool(jnp.all(out >= 0.0))          # final ReLU
    print("KERNEL_OK")
</pallas_src>

<mosaic_0001>
module attributes {stable_mosaic.version = 11 : i64} {
  func.func @bottleneck_kernel(%arg0: memref<2x64x128xf32, #tpu.memory_space<vmem>>, %arg1: memref<128x128xf32, #tpu.memory_space<vmem>>, %arg2: memref<1x128xf32, #tpu.memory_space<vmem>>, %arg3: memref<1x128xf32, #tpu.memory_space<vmem>>, %arg4: memref<1152x128xf32, #tpu.memory_space<vmem>>, %arg5: memref<1x128xf32, #tpu.memory_space<vmem>>, %arg6: memref<1x128xf32, #tpu.memory_space<vmem>>, %arg7: memref<128x128xf32, #tpu.memory_space<vmem>>, %arg8: memref<1x128xf32, #tpu.memory_space<vmem>>, %arg9: memref<1x128xf32, #tpu.memory_space<vmem>>, %arg10: memref<128x128xf32, #tpu.memory_space<vmem>>, %arg11: memref<2x64x128xf32, #tpu.memory_space<vmem>>) attributes {dimension_semantics = [], scalar_prefetch = 0 : i64, scratch_operands = 0 : i64, tpu.core_type = #tpu.core_type<tc>} {
    %c0 = arith.constant 0 : index
    %c0_0 = arith.constant 0 : index
    %c0_1 = arith.constant 0 : index
    %0 = vector.load %arg0[%c0, %c0_0, %c0_1] : memref<2x64x128xf32, #tpu.memory_space<vmem>>, vector<2x64x128xf32>
    %1 = vector.shape_cast %0 : vector<2x64x128xf32> to vector<128x128xf32>
    %c0_2 = arith.constant 0 : index
    %c0_3 = arith.constant 0 : index
    %2 = vector.load %arg1[%c0_2, %c0_3] : memref<128x128xf32, #tpu.memory_space<vmem>>, vector<128x128xf32>
    %cst = arith.constant dense<0.000000e+00> : vector<128x128xf32>
    %3 = tpu.matmul %1, %2, %cst {dimension_numbers = #tpu.dot_dimension_numbers<[1], [0], [0], [1], [0, 0, 1, 1], [], []>} : vector<128x128xf32>, vector<128x128xf32>, vector<128x128xf32> -> vector<128x128xf32>
    %c0_4 = arith.constant 0 : index
    %c0_5 = arith.constant 0 : index
    %4 = vector.load %arg2[%c0_4, %c0_5] : memref<1x128xf32, #tpu.memory_space<vmem>>, vector<1x128xf32>
    %c0_6 = arith.constant 0 : index
    %c0_7 = arith.constant 0 : index
    %5 = vector.load %arg3[%c0_6, %c0_7] : memref<1x128xf32, #tpu.memory_space<vmem>>, vector<1x128xf32>
    %cst_8 = arith.constant dense<0.000000e+00> : vector<128xf32>
    %6 = vector.multi_reduction <add>, %3, %cst_8 [0] : vector<128x128xf32> to vector<128xf32>
    %7 = vector.shape_cast %6 : vector<128xf32> to vector<1x128xf32>
    %cst_9 = arith.constant 1.280000e+02 : f32
    %8 = vector.broadcast %cst_9 : f32 to vector<1x128xf32>
    %9 = arith.divf %7, %8 : vector<1x128xf32>
    %10 = vector.broadcast %9 : vector<1x128xf32> to vector<128x128xf32>
    %11 = arith.subf %3, %10 : vector<128x128xf32>
    %12 = arith.mulf %11, %11 : vector<128x128xf32>
    %cst_10 = arith.constant dense<0.000000e+00> : vector<128xf32>
    %13 = vector.multi_reduction <add>, %12, %cst_10 [0] : vector<128x128xf32> to vector<128xf32>
    %14 = vector.shape_cast %13 : vector<128xf32> to vector<1x128xf32>
    %cst_11 = arith.constant 1.280000e+02 : f32
    %15 = vector.broadcast %cst_11 : f32 to vector<1x128xf32>
    %16 = arith.divf %14, %15 : vector<1x128xf32>
    %17 = vector.broadcast %9 : vector<1x128xf32> to vector<128x128xf32>
    %18 = arith.subf %3, %17 : vector<128x128xf32>
    %cst_12 = arith.constant 9.99999974E-6 : f32
    %19 = vector.broadcast %cst_12 : f32 to vector<1x128xf32>
    %20 = arith.addf %16, %19 : vector<1x128xf32>
    %21 = math.rsqrt %20 : vector<1x128xf32>
    %22 = arith.mulf %4, %21 : vector<1x128xf32>
    %23 = vector.broadcast %22 : vector<1x128xf32> to vector<128x128xf32>
    %24 = arith.mulf %18, %23 : vector<128x128xf32>
    %25 = vector.broadcast %5 : vector<1x128xf32> to vector<128x128xf32>
    %26 = arith.addf %24, %25 : vector<128x128xf32>
    %cst_13 = arith.constant 0.000000e+00 : f32
    %27 = vector.broadcast %cst_13 : f32 to vector<128x128xf32>
    %28 = arith.maximumf %26, %27 : vector<128x128xf32>
    %29 = tpu.iota {dimensions = array<i32: 1>} : vector<2x64x128xi32>
    %30 = vector.shape_cast %29 : vector<2x64x128xi32> to vector<128x128xi32>
    %31 = tpu.iota {dimensions = array<i32: 1>} : vector<16x8x128xi32>
    %32 = vector.shape_cast %31 : vector<16x8x128xi32> to vector<128x128xi32>
    %33 = vector.extract_strided_slice %28 {offsets = [119, 0], sizes = [9, 128], strides = [1, 1]} : vector<128x128xf32> to vector<9x128xf32>
    %34 = vector.extract_strided_slice %28 {offsets = [0, 0], sizes = [119, 128], strides = [1, 1]} : vector<128x128xf32> to vector<119x128xf32>
    %35 = tpu.concatenate %33, %34 in 0 : vector<9x128xf32>, vector<119x128xf32> -> vector<128x128xf32>
    %c8_i32 = arith.constant 8 : i32
    %36 = vector.broadcast %c8_i32 : i32 to vector<128x128xi32>
    %37 = arith.cmpi sge, %30, %36 : vector<128x128xi32>
    %c1_i32 = arith.constant 1 : i32
    %38 = vector.broadcast %c1_i32 : i32 to vector<128x128xi32>
    %39 = arith.cmpi sge, %32, %38 : vector<128x128xi32>
    %40 = arith.andi %37, %39 : vector<128x128xi1>
    %cst_14 = arith.constant 0.000000e+00 : f32
    %41 = vector.broadcast %cst_14 : f32 to vector<128x128xf32>
    %42 = arith.select %40, %35, %41 : vector<128x128xi1>, vector<128x128xf32>
    %43 = vector.extract_strided_slice %28 {offsets = [120, 0], sizes = [8, 128], strides = [1, 1]} : vector<128x128xf32> to vector<8x128xf32>
    %44 = vector.extract_strided_slice %28 {offsets = [0, 0], sizes = [120, 128], strides = [1, 1]} : vector<128x128xf32> to vector<120x128xf32>
    %45 = tpu.concatenate %43, %44 in 0 : vector<8x128xf32>, vector<120x128xf32> -> vector<128x128xf32>
    %c8_i32_15 = arith.constant 8 : i32
    %46 = vector.broadcast %c8_i32_15 : i32 to vector<128x128xi32>
    %47 = arith.cmpi sge, %30, %46 : vector<128x128xi32>
    %cst_16 = arith.constant 0.000000e+00 : f32
    %48 = vector.broadcast %cst_16 : f32 to vector<128x128xf32>
    %49 = arith.select %47, %45, %48 : vector<128x128xi1>, vector<128x128xf32>
    %50 = vector.extract_strided_slice %28 {offsets = [121, 0], sizes = [7, 128], strides = [1, 1]} : vector<128x128xf32> to vector<7x128xf32>
    %51 = vector.extract_strided_slice %28 {offsets = [0, 0], sizes = [121, 128], strides = [1, 1]} : vector<128x128xf32> to vector<121x128xf32>
    %52 = tpu.concatenate %50, %51 in 0 : vector<7x128xf32>, vector<121x128xf32> -> vector<128x128xf32>
    %c8_i32_17 = arith.constant 8 : i32
    %53 = vector.broadcast %c8_i32_17 : i32 to vector<128x128xi32>
    %54 = arith.cmpi sge, %30, %53 : vector<128x128xi32>
    %c7_i32 = arith.constant 7 : i32
    %55 = vector.broadcast %c7_i32 : i32 to vector<128x128xi32>
    %56 = arith.cmpi slt, %32, %55 : vector<128x128xi32>
    %57 = arith.andi %54, %56 : vector<128x128xi1>
    %cst_18 = arith.constant 0.000000e+00 : f32
    %58 = vector.broadcast %cst_18 : f32 to vector<128x128xf32>
    %59 = arith.select %57, %52, %58 : vector<128x128xi1>, vector<128x128xf32>
    %60 = vector.extract_strided_slice %28 {offsets = [127, 0], sizes = [1, 128], strides = [1, 1]} : vector<128x128xf32> to vector<1x128xf32>
    %61 = vector.extract_strided_slice %28 {offsets = [0, 0], sizes = [127, 128], strides = [1, 1]} : vector<128x128xf32> to vector<127x128xf32>
    %62 = tpu.concatenate %60, %61 in 0 : vector<1x128xf32>, vector<127x128xf32> -> vector<128x128xf32>
    %c1_i32_19 = arith.constant 1 : i32
    %63 = vector.broadcast %c1_i32_19 : i32 to vector<128x128xi32>
    %64 = arith.cmpi sge, %32, %63 : vector<128x128xi32>
    %cst_20 = arith.constant 0.000000e+00 : f32
    %65 = vector.broadcast %cst_20 : f32 to vector<128x128xf32>
    %66 = arith.select %64, %62, %65 : vector<128x128xi1>, vector<128x128xf32>
    %67 = vector.extract_strided_slice %28 {offsets = [1, 0], sizes = [127, 128], strides = [1, 1]} : vector<128x128xf32> to vector<127x128xf32>
    %68 = vector.extract_strided_slice %28 {offsets = [0, 0], sizes = [1, 128], strides = [1, 1]} : vector<128x128xf32> to vector<1x128xf32>
    %69 = tpu.concatenate %67, %68 in 0 : vector<127x128xf32>, vector<1x128xf32> -> vector<128x128xf32>
    %c7_i32_21 = arith.constant 7 : i32
    %70 = vector.broadcast %c7_i32_21 : i32 to vector<128x128xi32>
    %71 = arith.cmpi slt, %32, %70 : vector<128x128xi32>
    %cst_22 = arith.constant 0.000000e+00 : f32
    %72 = vector.broadcast %cst_22 : f32 to vector<128x128xf32>
    %73 = arith.select %71, %69, %72 : vector<128x128xi1>, vector<128x128xf32>
    %74 = vector.extract_strided_slice %28 {offsets = [7, 0], sizes = [121, 128], strides = [1, 1]} : vector<128x128xf32> to vector<121x128xf32>
    %75 = vector.extract_strided_slice %28 {offsets = [0, 0], sizes = [7, 128], strides = [1, 1]} : vector<128x128xf32> to vector<7x128xf32>
    %76 = tpu.concatenate %74, %75 in 0 : vector<121x128xf32>, vector<7x128xf32> -> vector<128x128xf32>
    %c56_i32 = arith.constant 56 : i32
    %77 = vector.broadcast %c56_i32 : i32 to vector<128x128xi32>
    %78 = arith.cmpi slt, %30, %77 : vector<128x128xi32>
    %c1_i32_23 = arith.constant 1 : i32
    %79 = vector.broadcast %c1_i32_23 : i32 to vector<128x128xi32>
    %80 = arith.cmpi sge, %32, %79 : vector<128x128xi32>
    %81 = arith.andi %78, %80 : vector<128x128xi1>
    %cst_24 = arith.constant 0.000000e+00 : f32
    %82 = vector.broadcast %cst_24 : f32 to vector<128x128xf32>
    %83 = arith.select %81, %76, %82 : vector<128x128xi1>, vector<128x128xf32>
    %84 = vector.extract_strided_slice %28 {offsets = [8, 0], sizes = [120, 128], strides = [1, 1]} : vector<128x128xf32> to vector<120x128xf32>
    %85 = vector.extract_strided_slice %28 {offsets = [0, 0], sizes = [8, 128], strides = [1, 1]} : vector<128x128xf32> to vector<8x128xf32>
    %86 = tpu.concatenate %84, %85 in 0 : vector<120x128xf32>, vector<8x128xf32> -> vector<128x128xf32>
    %c56_i32_25 = arith.constant 56 : i32
    %87 = vector.broadcast %c56_i32_25 : i32 to vector<128x128xi32>
    %88 = arith.cmpi slt, %30, %87 : vector<128x128xi32>
    %cst_26 = arith.constant 0.000000e+00 : f32
    %89 = vector.broadcast %cst_26 : f32 to vector<128x128xf32>
    %90 = arith.select %88, %86, %89 : vector<128x128xi1>, vector<128x128xf32>
    %91 = vector.extract_strided_slice %28 {offsets = [9, 0], sizes = [119, 128], strides = [1, 1]} : vector<128x128xf32> to vector<119x128xf32>
    %92 = vector.extract_strided_slice %28 {offsets = [0, 0], sizes = [9, 128], strides = [1, 1]} : vector<128x128xf32> to vector<9x128xf32>
    %93 = tpu.concatenate %91, %92 in 0 : vector<119x128xf32>, vector<9x128xf32> -> vector<128x128xf32>
    %c56_i32_27 = arith.constant 56 : i32
    %94 = vector.broadcast %c56_i32_27 : i32 to vector<128x128xi32>
    %95 = arith.cmpi slt, %30, %94 : vector<128x128xi32>
    %c7_i32_28 = arith.constant 7 : i32
    %96 = vector.broadcast %c7_i32_28 : i32 to vector<128x128xi32>
    %97 = arith.cmpi slt, %32, %96 : vector<128x128xi32>
    %98 = arith.andi %95, %97 : vector<128x128xi1>
    %cst_29 = arith.constant 0.000000e+00 : f32
    %99 = vector.broadcast %cst_29 : f32 to vector<128x128xf32>
    %100 = arith.select %98, %93, %99 : vector<128x128xi1>, vector<128x128xf32>
    %101 = tpu.concatenate %42, %49, %59, %66, %28, %73, %83, %90, %100 in 1 : vector<128x128xf32>, vector<128x128xf32>, vector<128x128xf32>, vector<128x128xf32>, vector<128x128xf32>, vector<128x128xf32>, vector<128x128xf32>, vector<128x128xf32>, vector<128x128xf32> -> vector<128x1152xf32>
    %c0_30 = arith.constant 0 : index
    %c0_31 = arith.constant 0 : index
    %102 = vector.load %arg4[%c0_30, %c0_31] : memref<1152x128xf32, #tpu.memory_space<vmem>>, vector<1152x128xf32>
    %cst_32 = arith.constant dense<0.000000e+00> : vector<128x128xf32>
    %103 = tpu.matmul %101, %102, %cst_32 {dimension_numbers = #tpu.dot_dimension_numbers<[1], [0], [0], [1], [0, 0, 1, 1], [], []>} : vector<128x1152xf32>, vector<1152x128xf32>, vector<128x128xf32> -> vector<128x128xf32>
    %c0_33 = arith.constant 0 : index
    %c0_34 = arith.constant 0 : index
    %104 = vector.load %arg5[%c0_33, %c0_34] : memref<1x128xf32, #tpu.memory_space<vmem>>, vector<1x128xf32>
    %c0_35 = arith.constant 0 : index
    %c0_36 = arith.constant 0 : index
    %105 = vector.load %arg6[%c0_35, %c0_36] : memref<1x128xf32, #tpu.memory_space<vmem>>, vector<1x128xf32>
    %cst_37 = arith.constant dense<0.000000e+00> : vector<128xf32>
    %106 = vector.multi_reduction <add>, %103, %cst_37 [0] : vector<128x128xf32> to vector<128xf32>
    %107 = vector.shape_cast %106 : vector<128xf32> to vector<1x128xf32>
    %cst_38 = arith.constant 1.280000e+02 : f32
    %108 = vector.broadcast %cst_38 : f32 to vector<1x128xf32>
    %109 = arith.divf %107, %108 : vector<1x128xf32>
    %110 = vector.broadcast %109 : vector<1x128xf32> to vector<128x128xf32>
    %111 = arith.subf %103, %110 : vector<128x128xf32>
    %112 = arith.mulf %111, %111 : vector<128x128xf32>
    %cst_39 = arith.constant dense<0.000000e+00> : vector<128xf32>
    %113 = vector.multi_reduction <add>, %112, %cst_39 [0] : vector<128x128xf32> to vector<128xf32>
    %114 = vector.shape_cast %113 : vector<128xf32> to vector<1x128xf32>
    %cst_40 = arith.constant 1.280000e+02 : f32
    %115 = vector.broadcast %cst_40 : f32 to vector<1x128xf32>
    %116 = arith.divf %114, %115 : vector<1x128xf32>
    %117 = vector.broadcast %109 : vector<1x128xf32> to vector<128x128xf32>
    %118 = arith.subf %103, %117 : vector<128x128xf32>
    %cst_41 = arith.constant 9.99999974E-6 : f32
    %119 = vector.broadcast %cst_41 : f32 to vector<1x128xf32>
    %120 = arith.addf %116, %119 : vector<1x128xf32>
    %121 = math.rsqrt %120 : vector<1x128xf32>
    %122 = arith.mulf %104, %121 : vector<1x128xf32>
    %123 = vector.broadcast %122 : vector<1x128xf32> to vector<128x128xf32>
    %124 = arith.mulf %118, %123 : vector<128x128xf32>
    %125 = vector.broadcast %105 : vector<1x128xf32> to vector<128x128xf32>
    %126 = arith.addf %124, %125 : vector<128x128xf32>
    %cst_42 = arith.constant 0.000000e+00 : f32
    %127 = vector.broadcast %cst_42 : f32 to vector<128x128xf32>
    %128 = arith.maximumf %126, %127 : vector<128x128xf32>
    %c0_43 = arith.constant 0 : index
    %c0_44 = arith.constant 0 : index
    %129 = vector.load %arg7[%c0_43, %c0_44] : memref<128x128xf32, #tpu.memory_space<vmem>>, vector<128x128xf32>
    %cst_45 = arith.constant dense<0.000000e+00> : vector<128x128xf32>
    %130 = tpu.matmul %128, %129, %cst_45 {dimension_numbers = #tpu.dot_dimension_numbers<[1], [0], [0], [1], [0, 0, 1, 1], [], []>} : vector<128x128xf32>, vector<128x128xf32>, vector<128x128xf32> -> vector<128x128xf32>
    %c0_46 = arith.constant 0 : index
    %c0_47 = arith.constant 0 : index
    %131 = vector.load %arg8[%c0_46, %c0_47] : memref<1x128xf32, #tpu.memory_space<vmem>>, vector<1x128xf32>
    %c0_48 = arith.constant 0 : index
    %c0_49 = arith.constant 0 : index
    %132 = vector.load %arg9[%c0_48, %c0_49] : memref<1x128xf32, #tpu.memory_space<vmem>>, vector<1x128xf32>
    %cst_50 = arith.constant dense<0.000000e+00> : vector<128xf32>
    %133 = vector.multi_reduction <add>, %130, %cst_50 [0] : vector<128x128xf32> to vector<128xf32>
    %134 = vector.shape_cast %133 : vector<128xf32> to vector<1x128xf32>
    %cst_51 = arith.constant 1.280000e+02 : f32
    %135 = vector.broadcast %cst_51 : f32 to vector<1x128xf32>
    %136 = arith.divf %134, %135 : vector<1x128xf32>
    %137 = vector.broadcast %136 : vector<1x128xf32> to vector<128x128xf32>
    %138 = arith.subf %130, %137 : vector<128x128xf32>
    %139 = arith.mulf %138, %138 : vector<128x128xf32>
    %cst_52 = arith.constant dense<0.000000e+00> : vector<128xf32>
    %140 = vector.multi_reduction <add>, %139, %cst_52 [0] : vector<128x128xf32> to vector<128xf32>
    %141 = vector.shape_cast %140 : vector<128xf32> to vector<1x128xf32>
    %cst_53 = arith.constant 1.280000e+02 : f32
    %142 = vector.broadcast %cst_53 : f32 to vector<1x128xf32>
    %143 = arith.divf %141, %142 : vector<1x128xf32>
    %144 = vector.broadcast %136 : vector<1x128xf32> to vector<128x128xf32>
    %145 = arith.subf %130, %144 : vector<128x128xf32>
    %cst_54 = arith.constant 9.99999974E-6 : f32
    %146 = vector.broadcast %cst_54 : f32 to vector<1x128xf32>
    %147 = arith.addf %143, %146 : vector<1x128xf32>
    %148 = math.rsqrt %147 : vector<1x128xf32>
    %149 = arith.mulf %131, %148 : vector<1x128xf32>
    %150 = vector.broadcast %149 : vector<1x128xf32> to vector<128x128xf32>
    %151 = arith.mulf %145, %150 : vector<128x128xf32>
    %152 = vector.broadcast %132 : vector<1x128xf32> to vector<128x128xf32>
    %153 = arith.addf %151, %152 : vector<128x128xf32>
    %154 = vector.shape_cast %153 : vector<128x128xf32> to vector<2x64x128xf32>
    %cst_55 = arith.constant dense<0.000000e+00> : vector<2x128xf32>
    %155 = vector.multi_reduction <add>, %154, %cst_55 [1] : vector<2x64x128xf32> to vector<2x128xf32>
    %cst_56 = arith.constant 6.400000e+01 : f32
    %156 = vector.broadcast %cst_56 : f32 to vector<2x128xf32>
    %157 = arith.divf %155, %156 : vector<2x128xf32>
    %c0_57 = arith.constant 0 : index
    %c0_58 = arith.constant 0 : index
    %158 = vector.load %arg10[%c0_57, %c0_58] : memref<128x128xf32, #tpu.memory_space<vmem>>, vector<128x128xf32>
    %cst_59 = arith.constant dense<0.000000e+00> : vector<2x128xf32>
    %159 = tpu.matmul %157, %158, %cst_59 {dimension_numbers = #tpu.dot_dimension_numbers<[1], [0], [0], [1], [0, 0, 1, 1], [], []>} : vector<2x128xf32>, vector<128x128xf32>, vector<2x128xf32> -> vector<2x128xf32>
    %160 = arith.negf %159 : vector<2x128xf32>
    %161 = math.exp %160 : vector<2x128xf32>
    %cst_60 = arith.constant 1.000000e+00 : f32
    %162 = vector.broadcast %cst_60 : f32 to vector<2x128xf32>
    %163 = arith.addf %162, %161 : vector<2x128xf32>
    %164 = arith.divf %162, %163 : vector<2x128xf32>
    %165 = vector.shape_cast %164 : vector<2x128xf32> to vector<2x1x128xf32>
    %166 = vector.broadcast %165 : vector<2x1x128xf32> to vector<2x64x128xf32>
    %167 = arith.mulf %154, %166 : vector<2x64x128xf32>
    %168 = arith.addf %167, %0 : vector<2x64x128xf32>
    %cst_61 = arith.constant 0.000000e+00 : f32
    %169 = vector.broadcast %cst_61 : f32 to vector<2x64x128xf32>
    %170 = arith.maximumf %168, %169 : vector<2x64x128xf32>
    %c0_62 = arith.constant 0 : index
    %c0_63 = arith.constant 0 : index
    %c0_64 = arith.constant 0 : index
    %171 = vector.load %arg11[%c0_62, %c0_63, %c0_64] : memref<2x64x128xf32, #tpu.memory_space<vmem>>, vector<2x64x128xf32>
    tpu.vector_store %arg11[%c0_62, %c0_63, %c0_64], %170 {strides = array<i32>} : memref<2x64x128xf32, #tpu.memory_space<vmem>>, vector<2x64x128xf32>,
    return
  }
}

</mosaic_0001>

<llo_original>
// kernel: tpu_custom_call.1
$region0: #{tpu_custom_call.1}
  #allocation0 [shape = 'u32[]', space=smem, size = 0x4, offset = 0x4, fixed_abs, tag = 'smem constant byte address 0x4 - core index']
  #allocation1 [shape = 'u32[144,128]{1,0:T(1,128)}', space=vmem, size = 0x12000, scoped, tag = 'internal scratch']
  %s0 = inlined_call_operand.hbm [shape: f32[2,64,128], index: 0, kind: input, shape index: {}]
  %s1 = inlined_call_operand.hbm [shape: f32[128,128], index: 1, kind: input, shape index: {}]
  %s2 = inlined_call_operand.hbm [shape: f32[1,128], index: 2, kind: input, shape index: {}]
  %s3 = inlined_call_operand.hbm [shape: f32[1,128], index: 3, kind: input, shape index: {}]
  %s4 = inlined_call_operand.hbm [shape: f32[1152,128], index: 4, kind: input, shape index: {}]
  %s5 = inlined_call_operand.hbm [shape: f32[1,128], index: 5, kind: input, shape index: {}]
  %s6 = inlined_call_operand.hbm [shape: f32[1,128], index: 6, kind: input, shape index: {}]
  %s7 = inlined_call_operand.hbm [shape: f32[128,128], index: 7, kind: input, shape index: {}]
  %s8 = inlined_call_operand.hbm [shape: f32[1,128], index: 8, kind: input, shape index: {}]
  %s9 = inlined_call_operand.hbm [shape: f32[1,128], index: 9, kind: input, shape index: {}]
  %s10 = inlined_call_operand.hbm [shape: f32[128,128], index: 10, kind: input, shape index: {}]
  %s11 = inlined_call_operand.hbm [shape: f32[2,64,128], index: 11, kind: output, shape index: {}]
  %s12 = sld [smem:[#allocation0]]
  $region98: #{tpu_custom_call.1} parent=0
    _
  %s14 = ssub.s32 1, %s12
  %s15 = scalar_select 0, %s14, %s12
  $region1: #{tpu_custom_call.1} parent=0
    #allocation2 [shape = 'u8[65536]{0}', space=vmem, size = 0x10000, scoped, tag = 'input window, operand 0, single buffered']
    #allocation3 [shape = 's32[1]{0}', space=sflag, size = 0x4, scoped, tag = 'scoped memory for tpu_custom_call.1']
    #allocation4 [shape = 's32[1]{0}', space=sflag, size = 0x4, scoped, tag = 'scoped memory for tpu_custom_call.1']
    #allocation5 [shape = 'u8[65536]{0}', space=vmem, size = 0x10000, scoped, tag = 'input window, operand 1, single buffered']
    #allocation6 [shape = 's32[1]{0}', space=sflag, size = 0x4, scoped, tag = 'scoped memory for tpu_custom_call.1']
    #allocation7 [shape = 'u8[512]{0}', space=vmem, size = 0x400, scoped, tag = 'input window, operand 2, single buffered']
    #allocation8 [shape = 'u8[512]{0}', space=vmem, size = 0x400, scoped, tag = 'input window, operand 3, single buffered']
    #allocation9 [shape = 's32[1]{0}', space=sflag, size = 0x4, scoped, tag = 'scoped memory for tpu_custom_call.1']
    #allocation10 [shape = 'u8[589824]{0}', space=vmem, size = 0x90000, scoped, tag = 'input window, operand 4, single buffered']
    #allocation11 [shape = 'u8[512]{0}', space=vmem, size = 0x400, scoped, tag = 'input window, operand 5, single buffered']
    #allocation12 [shape = 's32[1]{0}', space=sflag, size = 0x4, scoped, tag = 'scoped memory for tpu_custom_call.1']
    #allocation13 [shape = 'u8[512]{0}', space=vmem, size = 0x400, scoped, tag = 'input window, operand 6, single buffered']
    #allocation14 [shape = 'u8[65536]{0}', space=vmem, size = 0x10000, scoped, tag = 'input window, operand 7, single buffered']
    #allocation15 [shape = 's32[1]{0}', space=sflag, size = 0x4, scoped, tag = 'scoped memory for tpu_custom_call.1']
    #allocation16 [shape = 'u8[512]{0}', space=vmem, size = 0x400, scoped, tag = 'input window, operand 8, single buffered']
    #allocation17 [shape = 'u8[512]{0}', space=vmem, size = 0x400, scoped, tag = 'input window, operand 9, single buffered']
    #allocation18 [shape = 's32[1]{0}', space=sflag, size = 0x4, scoped, tag = 'scoped memory for tpu_custom_call.1']
    #allocation19 [shape = 'u8[65536]{0}', space=vmem, size = 0x10000, scoped, tag = 'input window, operand 10, single buffered']
    #allocation20 [shape = 'u8[65536]{0}', space=vmem, size = 0x10000, scoped, tag = 'output window, operand 0, single buffered']
    %16 = vsyncpa [#allocation3], 0
    %17 = vsyncpa [#allocation6], 0
    %18 = vsyncpa [#allocation9], 0
    %19 = vsyncpa [#allocation12], 0
    %20 = vsyncpa [#allocation15], 0
    %21 = vsyncpa [#allocation18], 0
    %22 = vsyncpa [#allocation4], 0
    // Predicated region
    $region2: #{tpu_custom_call.1} parent=1 // pred_check
      _
    $region3: #{tpu_custom_call.1} parent=1 // pred_check_branch
      %24 = sbr.rel (0) target = $region5
    $region4: #{tpu_custom_call.1} parent=1 // pred_region
      %s26 = ssub.s32 2048, 2048
      %27 = vsyncadd [#allocation3], %s26
      %s28 = sshll.u32 [#allocation2], 4
      %s29 = int_to_ptr.vmem [resolvable:$true] %s28
      %34 = dma.hbm_to_vmem [thread:$0]  %s0, 2048, %s29, [#allocation3], 128, 128, 8
    $region5: #{tpu_custom_call.1} parent=1 // pred_fallthru
      _
    // Predicated region
    $region6: #{tpu_custom_call.1} parent=1 // pred_check
      _
    $region7: #{tpu_custom_call.1} parent=1 // pred_check_branch
      %36 = sbr.rel (0) target = $region9
    $region8: #{tpu_custom_call.1} parent=1 // pred_region
      %s38 = ssub.s32 2048, 2048
      %39 = vsyncadd [#allocation6], %s38
      %s40 = sshll.u32 [#allocation5], 4
      %s41 = int_to_ptr.vmem [resolvable:$true] %s40
      %46 = dma.hbm_to_vmem [thread:$0]  %s1, 2048, %s41, [#allocation6], 128, 128, 8
    $region9: #{tpu_custom_call.1} parent=1 // pred_fallthru
      _
    // Predicated region
    $region10: #{tpu_custom_call.1} parent=1 // pred_check
      _
    $region11: #{tpu_custom_call.1} parent=1 // pred_check_branch
      %48 = sbr.rel (0) target = $region13
    $region12: #{tpu_custom_call.1} parent=1 // pred_region
      %s50 = ssub.s32 16, 16
      %51 = vsyncadd [#allocation6], %s50
      %s53 = sshll.u32 [#allocation7], 4
      %s54 = int_to_ptr.vmem [resolvable:$true] %s53
      %56 = dma.hbm_to_vmem [thread:$0]  %s2, 16, %s54, [#allocation6]
    $region13: #{tpu_custom_call.1} parent=1 // pred_fallthru
      _
    // Predicated region
    $region14: #{tpu_custom_call.1} parent=1 // pred_check
      _
    $region15: #{tpu_custom_call.1} parent=1 // pred_check_branch
      %58 = sbr.rel (0) target = $region17
    $region16: #{tpu_custom_call.1} parent=1 // pred_region
      %s60 = ssub.s32 16, 16
      %61 = vsyncadd [#allocation9], %s60
      %s63 = sshll.u32 [#allocation8], 4
      %s64 = int_to_ptr.vmem [resolvable:$true] %s63
      %66 = dma.hbm_to_vmem [thread:$0]  %s3, 16, %s64, [#allocation9]
    $region17: #{tpu_custom_call.1} parent=1 // pred_fallthru
      _
    // Predicated region
    $region18: #{tpu_custom_call.1} parent=1 // pred_check
      _
    $region19: #{tpu_custom_call.1} parent=1 // pred_check_branch
      %68 = sbr.rel (0) target = $region21
    $region20: #{tpu_custom_call.1} parent=1 // pred_region
      %s70 = ssub.s32 18432, 18432
      %71 = vsyncadd [#allocation9], %s70
      %s72 = sshll.u32 [#allocation10], 4
      %s73 = int_to_ptr.vmem [resolvable:$true] %s72
      %78 = dma.hbm_to_vmem [thread:$0]  %s4, 18432, %s73, [#allocation9], 128, 128, 8
    $region21: #{tpu_custom_call.1} parent=1 // pred_fallthru
      _
    // Predicated region
    $region22: #{tpu_custom_call.1} parent=1 // pred_check
      _
    $region23: #{tpu_custom_call.1} parent=1 // pred_check_branch
      %80 = sbr.rel (0) target = $region25
    $region24: #{tpu_custom_call.1} parent=1 // pred_region
      %s82 = ssub.s32 16, 16
      %83 = vsyncadd [#allocation12], %s82
      %s85 = sshll.u32 [#allocation11], 4
      %s86 = int_to_ptr.vmem [resolvable:$true] %s85
      %88 = dma.hbm_to_vmem [thread:$0]  %s5, 16, %s86, [#allocation12]
    $region25: #{tpu_custom_call.1} parent=1 // pred_fallthru
      _
    // Predicated region
    $region26: #{tpu_custom_call.1} parent=1 // pred_check
      _
    $region27: #{tpu_custom_call.1} parent=1 // pred_check_branch
      %90 = sbr.rel (0) target = $region29
    $region28: #{tpu_custom_call.1} parent=1 // pred_region
      %s92 = ssub.s32 16, 16
      %93 = vsyncadd [#allocation12], %s92
      %s95 = sshll.u32 [#allocation13], 4
      %s96 = int_to_ptr.vmem [resolvable:$true] %s95
      %98 = dma.hbm_to_vmem [thread:$0]  %s6, 16, %s96, [#allocation12]
    $region29: #{tpu_custom_call.1} parent=1 // pred_fallthru
      _
    // Predicated region
    $region30: #{tpu_custom_call.1} parent=1 // pred_check
      _
    $region31: #{tpu_custom_call.1} parent=1 // pred_check_branch
      %100 = sbr.rel (0) target = $region33
    $region32: #{tpu_custom_call.1} parent=1 // pred_region
      %s102 = ssub.s32 2048, 2048
      %103 = vsyncadd [#allocation15], %s102
      %s104 = sshll.u32 [#allocation14], 4
      %s105 = int_to_ptr.vmem [resolvable:$true] %s104
      %110 = dma.hbm_to_vmem [thread:$0]  %s7, 2048, %s105, [#allocation15], 128, 128, 8
    $region33: #{tpu_custom_call.1} parent=1 // pred_fallthru
      _
    // Predicated region
    $region34: #{tpu_custom_call.1} parent=1 // pred_check
      _
    $region35: #{tpu_custom_call.1} parent=1 // pred_check_branch
      %112 = sbr.rel (0) target = $region37
    $region36: #{tpu_custom_call.1} parent=1 // pred_region
      %s114 = ssub.s32 16, 16
      %115 = vsyncadd [#allocation15], %s114
      %s117 = sshll.u32 [#allocation16], 4
      %s118 = int_to_ptr.vmem [resolvable:$true] %s117
      %120 = dma.hbm_to_vmem [thread:$0]  %s8, 16, %s118, [#allocation15]
    $region37: #{tpu_custom_call.1} parent=1 // pred_fallthru
      _
    // Predicated region
    $region38: #{tpu_custom_call.1} parent=1 // pred_check
      _
    $region39: #{tpu_custom_call.1} parent=1 // pred_check_branch
      %122 = sbr.rel (0) target = $region41
    $region40: #{tpu_custom_call.1} parent=1 // pred_region
      %s124 = ssub.s32 16, 16
      %125 = vsyncadd [#allocation18], %s124
      %s127 = sshll.u32 [#allocation17], 4
      %s128 = int_to_ptr.vmem [resolvable:$true] %s127
      %130 = dma.hbm_to_vmem [thread:$0]  %s9, 16, %s128, [#allocation18]
    $region41: #{tpu_custom_call.1} parent=1 // pred_fallthru
      _
    // Predicated region
    $region42: #{tpu_custom_call.1} parent=1 // pred_check
      _
    $region43: #{tpu_custom_call.1} parent=1 // pred_check_branch
      %132 = sbr.rel (0) target = $region45
    $region44: #{tpu_custom_call.1} parent=1 // pred_region
      %s134 = ssub.s32 2048, 2048
      %135 = vsyncadd [#allocation18], %s134
      %s136 = sshll.u32 [#allocation19], 4
      %s137 = int_to_ptr.vmem [resolvable:$true] %s136
      %142 = dma.hbm_to_vmem [thread:$0]  %s10, 2048, %s137, [#allocation18], 128, 128, 8
    $region45: #{tpu_custom_call.1} parent=1 // pred_fallthru
      _
    // Predicated region
    $region46: #{tpu_custom_call.1} parent=1 // pred_check
      _
    $region47: #{tpu_custom_call.1} parent=1 // pred_check_branch
      %144 = sbr.rel (0) target = $region49
    $region48: #{tpu_custom_call.1} parent=1 // pred_region
      %145 = dma.done [#allocation3], 2048
    $region49: #{tpu_custom_call.1} parent=1 // pred_fallthru
      _
    // Predicated region
    $region50: #{tpu_custom_call.1} parent=1 // pred_check
      _
    $region51: #{tpu_custom_call.1} parent=1 // pred_check_branch
      %147 = sbr.rel (0) target = $region53
    $region52: #{tpu_custom_call.1} parent=1 // pred_region
      %148 = dma.done [#allocation6], 2048
    $region53: #{tpu_custom_call.1} parent=1 // pred_fallthru
      _
    // Predicated region
    $region54: #{tpu_custom_call.1} parent=1 // pred_check
      _
    $region55: #{tpu_custom_call.1} parent=1 // pred_check_branch
      %150 = sbr.rel (0) target = $region57
    $region56: #{tpu_custom_call.1} parent=1 // pred_region
      %151 = dma.done [#allocation6], 16
    $region57: #{tpu_custom_call.1} parent=1 // pred_fallthru
      _
    // Predicated region
    $region58: #{tpu_custom_call.1} parent=1 // pred_check
      _
    $region59: #{tpu_custom_call.1} parent=1 // pred_check_branch
      %153 = sbr.rel (0) target = $region61
    $region60: #{tpu_custom_call.1} parent=1 // pred_region
      %154 = dma.done [#allocation9], 16
    $region61: #{tpu_custom_call.1} parent=1 // pred_fallthru
      _
    // Predicated region
    $region62: #{tpu_custom_call.1} parent=1 // pred_check
      _
    $region63: #{tpu_custom_call.1} parent=1 // pred_check_branch
      %156 = sbr.rel (0) target = $region65
    $region64: #{tpu_custom_call.1} parent=1 // pred_region
      %157 = dma.done [#allocation9], 18432
    $region65: #{tpu_custom_call.1} parent=1 // pred_fallthru
      _
    // Predicated region
    $region66: #{tpu_custom_call.1} parent=1 // pred_check
      _
    $region67: #{tpu_custom_call.1} parent=1 // pred_check_branch
      %159 = sbr.rel (0) target = $region69
    $region68: #{tpu_custom_call.1} parent=1 // pred_region
      %160 = dma.done [#allocation12], 16
    $region69: #{tpu_custom_call.1} parent=1 // pred_fallthru
      _
    // Predicated region
    $region70: #{tpu_custom_call.1} parent=1 // pred_check
      _
    $region71: #{tpu_custom_call.1} parent=1 // pred_check_branch
      %162 = sbr.rel (0) target = $region73
    $region72: #{tpu_custom_call.1} parent=1 // pred_region
      %163 = dma.done [#allocation12], 16
    $region73: #{tpu_custom_call.1} parent=1 // pred_fallthru
      _
    // Predicated region
    $region74: #{tpu_custom_call.1} parent=1 // pred_check
      _
    $region75: #{tpu_custom_call.1} parent=1 // pred_check_branch
      %165 = sbr.rel (0) target = $region77
    $region76: #{tpu_custom_call.1} parent=1 // pred_region
      %166 = dma.done [#allocation15], 2048
    $region77: #{tpu_custom_call.1} parent=1 // pred_fallthru
      _
    // Predicated region
    $region78: #{tpu_custom_call.1} parent=1 // pred_check
      _
    $region79: #{tpu_custom_call.1} parent=1 // pred_check_branch
      %168 = sbr.rel (0) target = $region81
    $region80: #{tpu_custom_call.1} parent=1 // pred_region
      %169 = dma.done [#allocation15], 16
    $region81: #{tpu_custom_call.1} parent=1 // pred_fallthru
      _
    // Predicated region
    $region82: #{tpu_custom_call.1} parent=1 // pred_check
      _
    $region83: #{tpu_custom_call.1} parent=1 // pred_check_branch
      %171 = sbr.rel (0) target = $region85
    $region84: #{tpu_custom_call.1} parent=1 // pred_region
      %172 = dma.done [#allocation18], 16
    $region85: #{tpu_custom_call.1} parent=1 // pred_fallthru
      _
    // Predicated region
    $region86: #{tpu_custom_call.1} parent=1 // pred_check
      _
    $region87: #{tpu_custom_call.1} parent=1 // pred_check_branch
      %174 = sbr.rel (0) target = $region89
    $region88: #{tpu_custom_call.1} parent=1 // pred_region
      %175 = dma.done [#allocation18], 2048
    $region89: #{tpu_custom_call.1} parent=1 // pred_fallthru
      _
    %v176 = vld [vmem:[#allocation2] sm:$0xff]
    %v177 = vld [vmem:[#allocation2 + $0x8] sm:$0xff]
    %v178 = vld [vmem:[#allocation2 + $0x10] sm:$0xff]
    %v179 = vld [vmem:[#allocation2 + $0x18] sm:$0xff]
    %v180 = vld [vmem:[#allocation2 + $0x20] sm:$0xff]
    %v181 = vld [vmem:[#allocation2 + $0x28] sm:$0xff]
    %v182 = vld [vmem:[#allocation2 + $0x30] sm:$0xff]
    %v183 = vld [vmem:[#allocation2 + $0x38] sm:$0xff]
    %v184 = vld [vmem:[#allocation2 + $0x40] sm:$0xff]
    %v185 = vld [vmem:[#allocation2 + $0x48] sm:$0xff]
    %v186 = vld [vmem:[#allocation2 + $0x50] sm:$0xff]
    %v187 = vld [vmem:[#allocation2 + $0x58] sm:$0xff]
    %v188 = vld [vmem:[#allocation2 + $0x60] sm:$0xff]
    %v189 = vld [vmem:[#allocation2 + $0x68] sm:$0xff]
    %v190 = vld [vmem:[#allocation2 + $0x70] sm:$0xff]
    %v191 = vld [vmem:[#allocation2 + $0x78] sm:$0xff]
    %v192 = vld [vmem:[#allocation5] sm:$0xff]
    %v193 = vld [vmem:[#allocation5 + $0x8] sm:$0xff]
    %v194 = vld [vmem:[#allocation5 + $0x10] sm:$0xff]
    %v195 = vld [vmem:[#allocation5 + $0x18] sm:$0xff]
    %v196 = vld [vmem:[#allocation5 + $0x20] sm:$0xff]
    %v197 = vld [vmem:[#allocation5 + $0x28] sm:$0xff]
    %v198 = vld [vmem:[#allocation5 + $0x30] sm:$0xff]
    %v199 = vld [vmem:[#allocation5 + $0x38] sm:$0xff]
    %v200 = vld [vmem:[#allocation5 + $0x40] sm:$0xff]
    %v201 = vld [vmem:[#allocation5 + $0x48] sm:$0xff]
    %v202 = vld [vmem:[#allocation5 + $0x50] sm:$0xff]
    %v203 = vld [vmem:[#allocation5 + $0x58] sm:$0xff]
    %v204 = vld [vmem:[#allocation5 + $0x60] sm:$0xff]
    %v205 = vld [vmem:[#allocation5 + $0x68] sm:$0xff]
    %v206 = vld [vmem:[#allocation5 + $0x70] sm:$0xff]
    %v207 = vld [vmem:[#allocation5 + $0x78] sm:$0xff]
    %208 = vmatprep.subr.mxu0 0.0
    %209 = vmatpush1.msra.mxu0 %v192
    %210 = vmatprep.subr.mxu0 0.0
    %211 = vmatpush1.msra.mxu0 %v193
    %212 = vmatprep.subr.mxu0 0.0
    %213 = vmatpush1.msra.mxu0 %v194
    %214 = vmatprep.subr.mxu0 0.0
    %215 = vmatpush1.msra.mxu0 %v195
    %216 = vmatprep.subr.mxu0 0.0
    %217 = vmatpush1.msra.mxu0 %v196
    %218 = vmatprep.subr.mxu0 0.0
    %219 = vmatpush1.msra.mxu0 %v197
    %220 = vmatprep.subr.mxu0 0.0
    %221 = vmatpush1.msra.mxu0 %v198
    %222 = vmatprep.subr.mxu0 0.0
    %223 = vmatpush1.msra.mxu0 %v199
    %224 = vmatprep.subr.mxu0 0.0
    %225 = vmatpush1.msra.mxu0 %v200
    %226 = vmatprep.subr.mxu0 0.0
    %227 = vmatpush1.msra.mxu0 %v201
    %228 = vmatprep.subr.mxu0 0.0
    %229 = vmatpush1.msra.mxu0 %v202
    %230 = vmatprep.subr.mxu0 0.0
    %231 = vmatpush1.msra.mxu0 %v203
    %232 = vmatprep.subr.mxu0 0.0
    %233 = vmatpush1.msra.mxu0 %v204
    %234 = vmatprep.subr.mxu0 0.0
    %235 = vmatpush1.msra.mxu0 %v205
    %236 = vmatprep.subr.mxu0 0.0
    %237 = vmatpush1.msra.mxu0 %v206
    %238 = vmatprep.subr.mxu0 0.0
    %239 = vmatpush1.msra.mxu0 %v207
    %240 = vmatprep.subr.mxu0 0.0
    %241 = vmatpush1.msra.mxu0 0.0
    %242 = vmatprep.subr.mxu0 0.0
    %243 = vmatpush1.msra.mxu0 0.0
    %244 = vmatprep.subr.mxu0 0.0
    %245 = vmatpush1.msra.mxu0 0.0
    %246 = vmatprep.subr.mxu0 0.0
    %247 = vmatpush1.msra.mxu0 0.0
    %248 = vmatprep.subr.mxu0 0.0
    %249 = vmatpush1.msra.mxu0 0.0
    %250 = vmatprep.subr.mxu0 0.0
    %251 = vmatpush1.msra.mxu0 0.0
    %252 = vmatprep.subr.mxu0 0.0
    %253 = vmatpush1.msra.mxu0 0.0
    %254 = vmatprep.subr.mxu0 0.0
    %255 = vmatpush1.msra.mxu0 0.0
    %256 = vmatprep.subr.mxu0 0.0
    %257 = vmatpush1.msra.mxu0 0.0
    %258 = vmatprep.subr.mxu0 0.0
    %259 = vmatpush1.msra.mxu0 0.0
    %260 = vmatprep.subr.mxu0 0.0
    %261 = vmatpush1.msra.mxu0 0.0
    %262 = vmatprep.subr.mxu0 0.0
    %263 = vmatpush1.msra.mxu0 0.0
    %264 = vmatprep.subr.mxu0 0.0
    %265 = vmatpush1.msra.mxu0 0.0
    %266 = vmatprep.subr.mxu0 0.0
    %267 = vmatpush1.msra.mxu0 0.0
    %268 = vmatprep.subr.mxu0 0.0
    %269 = vmatpush1.msra.mxu0 0.0
    %270 = vmatprep.subr.mxu0 0.0
    %271 = vmatpush1.msra.mxu0 0.0
    %272 = vmatprep.mubr.f32.mxu0 0.0
    %273 = vmatmul.mubr.f32.gmra.mrb[0].mxu0 %v176
    %v274 = vpop.f32.mrb[0].mxu0
    %v275 = vadd.f32 0.0, %v274
    %v276 = vpop.f32.mrb[0].mxu0
    %277 = vmatprep.mubr.f32.mxu0 0.0
    %278 = vmatmul.mubr.f32.gmra.mrb[0].mxu0 %v177
    %v279 = vpop.f32.mrb[0].mxu0
    %v280 = vadd.f32 0.0, %v279
    %v281 = vpop.f32.mrb[0].mxu0
    %282 = vmatprep.mubr.f32.mxu0 0.0
    %283 = vmatmul.mubr.f32.gmra.mrb[0].mxu0 %v178
    %v284 = vpop.f32.mrb[0].mxu0
    %v285 = vadd.f32 0.0, %v284
    %v286 = vpop.f32.mrb[0].mxu0
    %287 = vmatprep.mubr.f32.mxu0 0.0
    %288 = vmatmul.mubr.f32.gmra.mrb[0].mxu0 %v179
    %v289 = vpop.f32.mrb[0].mxu0
    %v290 = vadd.f32 0.0, %v289
    %v291 = vpop.f32.mrb[0].mxu0
    %292 = vmatprep.mubr.f32.mxu0 0.0
    %293 = vmatmul.mubr.f32.gmra.mrb[0].mxu0 %v180
    %v294 = vpop.f32.mrb[0].mxu0
    %v295 = vadd.f32 0.0, %v294
    %v296 = vpop.f32.mrb[0].mxu0
    %297 = vmatprep.mubr.f32.mxu0 0.0
    %298 = vmatmul.mubr.f32.gmra.mrb[0].mxu0 %v181
    %v299 = vpop.f32.mrb[0].mxu0
    %v300 = vadd.f32 0.0, %v299
    %v301 = vpop.f32.mrb[0].mxu0
    %302 = vmatprep.mubr.f32.mxu0 0.0
    %303 = vmatmul.mubr.f32.gmra.mrb[0].mxu0 %v182
    %v304 = vpop.f32.mrb[0].mxu0
    %v305 = vadd.f32 0.0, %v304
    %v306 = vpop.f32.mrb[0].mxu0
    %307 = vmatprep.mubr.f32.mxu0 0.0
    %308 = vmatmul.mubr.f32.gmra.mrb[0].mxu0 %v183
    %v309 = vpop.f32.mrb[0].mxu0
    %v310 = vadd.f32 0.0, %v309
    %v311 = vpop.f32.mrb[0].mxu0
    %312 = vmatprep.mubr.f32.mxu0 0.0
    %313 = vmatmul.mubr.f32.gmra.mrb[0].mxu0 %v184
    %v314 = vpop.f32.mrb[0].mxu0
    %v315 = vadd.f32 0.0, %v314
    %v316 = vpop.f32.mrb[0].mxu0
    %317 = vmatprep.mubr.f32.mxu0 0.0
    %318 = vmatmul.mubr.f32.gmra.mrb[0].mxu0 %v185
    %v319 = vpop.f32.mrb[0].mxu0
    %v320 = vadd.f32 0.0, %v319
    %v321 = vpop.f32.mrb[0].mxu0
    %322 = vmatprep.mubr.f32.mxu0 0.0
    %323 = vmatmul.mubr.f32.gmra.mrb[0].mxu0 %v186
    %v324 = vpop.f32.mrb[0].mxu0
    %v325 = vadd.f32 0.0, %v324
    %v326 = vpop.f32.mrb[0].mxu0
    %327 = vmatprep.mubr.f32.mxu0 0.0
    %328 = vmatmul.mubr.f32.gmra.mrb[0].mxu0 %v187
    %v329 = vpop.f32.mrb[0].mxu0
    %v330 = vadd.f32 0.0, %v329
    %v331 = vpop.f32.mrb[0].mxu0
    %332 = vmatprep.mubr.f32.mxu0 0.0
    %333 = vmatmul.mubr.f32.gmra.mrb[0].mxu0 %v188
    %v334 = vpop.f32.mrb[0].mxu0
    %v335 = vadd.f32 0.0, %v334
    %v336 = vpop.f32.mrb[0].mxu0
    %337 = vmatprep.mubr.f32.mxu0 0.0
    %338 = vmatmul.mubr.f32.gmra.mrb[0].mxu0 %v189
    %v339 = vpop.f32.mrb[0].mxu0
    %v340 = vadd.f32 0.0, %v339
    %v341 = vpop.f32.mrb[0].mxu0
    %342 = vmatprep.mubr.f32.mxu0 0.0
    %343 = vmatmul.mubr.f32.gmra.mrb[0].mxu0 %v190
    %v344 = vpop.f32.mrb[0].mxu0
    %v345 = vadd.f32 0.0, %v344
    %v346 = vpop.f32.mrb[0].mxu0
    %347 = vmatprep.mubr.f32.mxu0 0.0
    %348 = vmatmul.mubr.f32.gmra.mrb[0].mxu0 %v191
    %v349 = vpop.f32.mrb[0].mxu0
    %v350 = vadd.f32 0.0, %v349
    %v351 = vpop.f32.mrb[0].mxu0
    %352 = vdwg.mxu0
    %v353 = vld [vmem:[#allocation7] sm:$0x1]
    %v354 = vld [vmem:[#allocation8] sm:$0x1]
    %v355 = vadd.f32 %v275, %v280
    %v356 = vadd.f32 %v355, %v285
    %v357 = vadd.f32 %v356, %v290
    %v358 = vadd.f32 %v357, %v295
    %v359 = vadd.f32 %v358, %v300
    %v360 = vadd.f32 %v359, %v305
    %v361 = vadd.f32 %v360, %v310
    %v362 = vadd.f32 %v361, %v315
    %v363 = vadd.f32 %v362, %v320
    %v364 = vadd.f32 %v363, %v325
    %v365 = vadd.f32 %v364, %v330
    %v366 = vadd.f32 %v365, %v335
    %v367 = vadd.f32 %v366, %v340
    %v368 = vadd.f32 %v367, %v345
    %v369 = vadd.f32 %v368, %v350
    %v370 = vrot.slane %v369, 4
    %v371 = vadd.f32 %v369, %v370
    %v372 = vrot.slane %v371, 2
    %v373 = vadd.f32 %v371, %v372
    %v374 = vrot.slane %v373, 1
    %v375 = vadd.f32 %v373, %v374
    %v376 = vrcp.pop 128.0
    %v377 = vmul.f32 %v375, %v376
    %v378 = vsub.f32 %v275, %v377
    %v379 = vsub.f32 %v280, %v377
    %v380 = vsub.f32 %v285, %v377
    %v381 = vsub.f32 %v290, %v377
    %v382 = vsub.f32 %v295, %v377
    %v383 = vsub.f32 %v300, %v377
    %v384 = vsub.f32 %v305, %v377
    %v385 = vsub.f32 %v310, %v377
    %v386 = vsub.f32 %v315, %v377
    %v387 = vsub.f32 %v320, %v377
    %v388 = vsub.f32 %v325, %v377
    %v389 = vsub.f32 %v330, %v377
    %v390 = vsub.f32 %v335, %v377
    %v391 = vsub.f32 %v340, %v377
    %v392 = vsub.f32 %v345, %v377
    %v393 = vsub.f32 %v350, %v377
    %v394 = vmul.f32 %v378, %v378
    %v395 = vmul.f32 %v379, %v379
    %v396 = vmul.f32 %v380, %v380
    %v397 = vmul.f32 %v381, %v381
    %v398 = vmul.f32 %v382, %v382
    %v399 = vmul.f32 %v383, %v383
    %v400 = vmul.f32 %v384, %v384
    %v401 = vmul.f32 %v385, %v385
    %v402 = vmul.f32 %v386, %v386
    %v403 = vmul.f32 %v387, %v387
    %v404 = vmul.f32 %v388, %v388
    %v405 = vmul.f32 %v389, %v389
    %v406 = vmul.f32 %v390, %v390
    %v407 = vmul.f32 %v391, %v391
    %v408 = vmul.f32 %v392, %v392
    %v409 = vmul.f32 %v393, %v393
    %v410 = vadd.f32 %v394, %v395
    %v411 = vadd.f32 %v410, %v396
    %v412 = vadd.f32 %v411, %v397
    %v413 = vadd.f32 %v412, %v398
    %v414 = vadd.f32 %v413, %v399
    %v415 = vadd.f32 %v414, %v400
    %v416 = vadd.f32 %v415, %v401
    %v417 = vadd.f32 %v416, %v402
    %v418 = vadd.f32 %v417, %v403
    %v419 = vadd.f32 %v418, %v404
    %v420 = vadd.f32 %v419, %v405
    %v421 = vadd.f32 %v420, %v406
    %v422 = vadd.f32 %v421, %v407
    %v423 = vadd.f32 %v422, %v408
    %v424 = vadd.f32 %v423, %v409
    %v425 = vrot.slane %v424, 4
    %v426 = vadd.f32 %v424, %v425
    %v427 = vrot.slane %v426, 2
    %v428 = vadd.f32 %v426, %v427
    %v429 = vrot.slane %v428, 1
    %v430 = vadd.f32 %v428, %v429
    %v431 = vmul.f32 %v430, %v376
    %v432 = vadd.f32 %v431, 1e-05
    %v433 = vrsqrt.pop %v432
    %v434 = vmul.f32 %v353, %v433
    %v436 = vlaneseq
    %v437 = vshrl.u32 %v436, 7
    %v438 = vsub.s32 0, %v437
    %v439 = vrot.slane %v434, %v438
    %v441 = vmul.f32 %v378, %v439
    %v442 = vmul.f32 %v379, %v439
    %v443 = vmul.f32 %v380, %v439
    %v444 = vmul.f32 %v381, %v439
    %v445 = vmul.f32 %v382, %v439
    %v446 = vmul.f32 %v383, %v439
    %v447 = vmul.f32 %v384, %v439
    %v448 = vmul.f32 %v385, %v439
    %v449 = vmul.f32 %v386, %v439
    %v450 = vmul.f32 %v387, %v439
    %v451 = vmul.f32 %v388, %v439
    %v452 = vmul.f32 %v389, %v439
    %v453 = vmul.f32 %v390, %v439
    %v454 = vmul.f32 %v391, %v439
    %v455 = vmul.f32 %v392, %v439
    %v456 = vmul.f32 %v393, %v439
    %v458 = vlaneseq
    %v459 = vshrl.u32 %v458, 7
    %v460 = vsub.s32 0, %v459
    %v461 = vrot.slane %v354, %v460
    %v463 = vadd.f32 %v441, %v461
    %v464 = vadd.f32 %v442, %v461
    %v465 = vadd.f32 %v443, %v461
    %v466 = vadd.f32 %v444, %v461
    %v467 = vadd.f32 %v445, %v461
    %v468 = vadd.f32 %v446, %v461
    %v469 = vadd.f32 %v447, %v461
    %v470 = vadd.f32 %v448, %v461
    %v471 = vadd.f32 %v449, %v461
    %v472 = vadd.f32 %v450, %v461
    %v473 = vadd.f32 %v451, %v461
    %v474 = vadd.f32 %v452, %v461
    %v475 = vadd.f32 %v453, %v461
    %v476 = vadd.f32 %v454, %v461
    %v477 = vadd.f32 %v455, %v461
    %v478 = vadd.f32 %v456, %v461
    %v479 = vmax.f32 %v463, 0.0
    %v480 = vmax.f32 %v464, 0.0
    %v481 = vmax.f32 %v465, 0.0
    %v482 = vmax.f32 %v466, 0.0
    %v483 = vmax.f32 %v467, 0.0
    %v484 = vmax.f32 %v468, 0.0
    %v485 = vmax.f32 %v469, 0.0
    %v486 = vmax.f32 %v470, 0.0
    %v487 = vmax.f32 %v471, 0.0
    %v488 = vmax.f32 %v472, 0.0
    %v489 = vmax.f32 %v473, 0.0
    %v490 = vmax.f32 %v474, 0.0
    %v491 = vmax.f32 %v475, 0.0
    %v492 = vmax.f32 %v476, 0.0
    %v493 = vmax.f32 %v477, 0.0
    %v494 = vmax.f32 %v478, 0.0
    %v495 = vlaneseq
    %v496 = vshrl.u32 %v495, 7
    %v497 = vadd.s32 %v496, 8
    %v498 = vadd.s32 %v496, 16
    %v499 = vadd.s32 %v496, 24
    %v500 = vadd.s32 %v496, 32
    %v501 = vadd.s32 %v496, 40
    %v502 = vadd.s32 %v496, 48
    %v503 = vadd.s32 %v496, 56
    %vm506 = vcmask 1040384
    %v507 = vrot.slane %v493, 7
    %v508 = vrot.slane %v494, 7
    %v509 = vsel %vm506, %v507, %v508
    %v526 = vrot.slane %v479, 7
    %v527 = vrot.slane %v480, 7
    %v528 = vsel %vm506, %v526, %v527
    %v529 = vrot.slane %v481, 7
    %v530 = vsel %vm506, %v527, %v529
    %v531 = vrot.slane %v482, 7
    %v532 = vsel %vm506, %v529, %v531
    %v533 = vrot.slane %v483, 7
    %v534 = vsel %vm506, %v531, %v533
    %v535 = vrot.slane %v484, 7
    %v536 = vsel %vm506, %v533, %v535
    %v537 = vrot.slane %v485, 7
    %v538 = vsel %vm506, %v535, %v537
    %v539 = vrot.slane %v486, 7
    %v540 = vsel %vm506, %v537, %v539
    %v541 = vrot.slane %v487, 7
    %v542 = vsel %vm506, %v539, %v541
    %v543 = vrot.slane %v488, 7
    %v544 = vsel %vm506, %v541, %v543
    %v545 = vrot.slane %v489, 7
    %v546 = vsel %vm506, %v543, %v545
    %v547 = vrot.slane %v490, 7
    %v548 = vsel %vm506, %v545, %v547
    %v549 = vrot.slane %v491, 7
    %v550 = vsel %vm506, %v547, %v549
    %v551 = vrot.slane %v492, 7
    %v552 = vsel %vm506, %v549, %v551
    %v553 = vsel %vm506, %v551, %v507
    %v569 = vsel %vm506, %v508, %v526
    %vm570 = vcmp.ge.s32.totalorder %v496, 8
    %vm571 = vcmp.ge.s32.totalorder %v497, 8
    %vm572 = vcmp.ge.s32.totalorder %v498, 8
    %vm573 = vcmp.ge.s32.totalorder %v499, 8
    %vm574 = vcmp.ge.s32.totalorder %v500, 8
    %vm575 = vcmp.ge.s32.totalorder %v501, 8
    %vm576 = vcmp.ge.s32.totalorder %v502, 8
    %vm577 = vcmp.ge.s32.totalorder %v503, 8
    %vm578 = vcmp.ge.s32.totalorder %v496, 1
    %vm579 = vmand %vm570, %vm578
    %vm580 = vmand %vm571, %vm578
    %vm581 = vmand %vm572, %vm578
    %vm582 = vmand %vm573, %vm578
    %vm583 = vmand %vm574, %vm578
    %vm584 = vmand %vm575, %vm578
    %vm585 = vmand %vm576, %vm578
    %vm586 = vmand %vm577, %vm578
    %v587 = vsel %vm579, %v509, 0.0
    %v588 = vsel %vm580, %v569, 0.0
    %v589 = vsel %vm581, %v528, 0.0
    %v590 = vsel %vm582, %v530, 0.0
    %v591 = vsel %vm583, %v532, 0.0
    %v592 = vsel %vm584, %v534, 0.0
    %v593 = vsel %vm585, %v536, 0.0
    %v594 = vsel %vm586, %v538, 0.0
    %v595 = vsel %vm579, %v540, 0.0
    %v596 = vsel %vm580, %v542, 0.0
    %v597 = vsel %vm581, %v544, 0.0
    %v598 = vsel %vm582, %v546, 0.0
    %v599 = vsel %vm583, %v548, 0.0
    %v600 = vsel %vm584, %v550, 0.0
    %v601 = vsel %vm585, %v552, 0.0
    %v602 = vsel %vm586, %v553, 0.0
    %v603 = vsel %vm570, %v494, 0.0
    %v604 = vsel %vm571, %v479, 0.0
    %v605 = vsel %vm572, %v480, 0.0
    %v606 = vsel %vm573, %v481, 0.0
    %v607 = vsel %vm574, %v482, 0.0
    %v608 = vsel %vm575, %v483, 0.0
    %v609 = vsel %vm576, %v484, 0.0
    %v610 = vsel %vm577, %v485, 0.0
    %v611 = vsel %vm570, %v486, 0.0
    %v612 = vsel %vm571, %v487, 0.0
    %v613 = vsel %vm572, %v488, 0.0
    %v614 = vsel %vm573, %v489, 0.0
    %v615 = vsel %vm574, %v490, 0.0
    %v616 = vsel %vm575, %v491, 0.0
    %v617 = vsel %vm576, %v492, 0.0
    %v618 = vsel %vm577, %v493, 0.0
    %v619 = vrot.slane %v494, 1
    %vm621 = vcmask 1046528
    %v622 = vrot.slane %v479, 1
    %v623 = vrot.slane %v480, 1
    %v624 = vsel %vm621, %v622, %v623
    %v625 = vrot.slane %v481, 1
    %v626 = vsel %vm621, %v623, %v625
    %v627 = vrot.slane %v482, 1
    %v628 = vsel %vm621, %v625, %v627
    %v629 = vrot.slane %v483, 1
    %v630 = vsel %vm621, %v627, %v629
    %v631 = vrot.slane %v484, 1
    %v632 = vsel %vm621, %v629, %v631
    %v633 = vrot.slane %v485, 1
    %v634 = vsel %vm621, %v631, %v633
    %v635 = vrot.slane %v486, 1
    %v636 = vsel %vm621, %v633, %v635
    %v637 = vrot.slane %v487, 1
    %v638 = vsel %vm621, %v635, %v637
    %v639 = vrot.slane %v488, 1
    %v640 = vsel %vm621, %v637, %v639
    %v641 = vrot.slane %v489, 1
    %v642 = vsel %vm621, %v639, %v641
    %v643 = vrot.slane %v490, 1
    %v644 = vsel %vm621, %v641, %v643
    %v645 = vrot.slane %v491, 1
    %v646 = vsel %vm621, %v643, %v645
    %v647 = vrot.slane %v492, 1
    %v648 = vsel %vm621, %v645, %v647
    %v649 = vrot.slane %v493, 1
    %v650 = vsel %vm621, %v647, %v649
    %v651 = vsel %vm621, %v649, %v619
    %v668 = vsel %vm621, %v619, %v622
    %vm669 = vcmp.lt.s32.totalorder %v496, 7
    %vm670 = vmand %vm570, %vm669
    %vm671 = vmand %vm571, %vm669
    %vm672 = vmand %vm572, %vm669
    %vm673 = vmand %vm573, %vm669
    %vm674 = vmand %vm574, %vm669
    %vm675 = vmand %vm575, %vm669
    %vm676 = vmand %vm576, %vm669
    %vm677 = vmand %vm577, %vm669
    %v678 = vsel %vm670, %v668, 0.0
    %v679 = vsel %vm671, %v624, 0.0
    %v680 = vsel %vm672, %v626, 0.0
    %v681 = vsel %vm673, %v628, 0.0
    %v682 = vsel %vm674, %v630, 0.0
    %v683 = vsel %vm675, %v632, 0.0
    %v684 = vsel %vm676, %v634, 0.0
    %v685 = vsel %vm677, %v636, 0.0
    %v686 = vsel %vm670, %v638, 0.0
    %v687 = vsel %vm671, %v640, 0.0
    %v688 = vsel %vm672, %v642, 0.0
    %v689 = vsel %vm673, %v644, 0.0
    %v690 = vsel %vm674, %v646, 0.0
    %v691 = vsel %vm675, %v648, 0.0
    %v692 = vsel %vm676, %v650, 0.0
    %v693 = vsel %vm677, %v651, 0.0
    %v694 = vsel %vm578, %v569, 0.0
    %v695 = vsel %vm578, %v528, 0.0
    %v696 = vsel %vm578, %v530, 0.0
    %v697 = vsel %vm578, %v532, 0.0
    %v698 = vsel %vm578, %v534, 0.0
    %v699 = vsel %vm578, %v536, 0.0
    %v700 = vsel %vm578, %v538, 0.0
    %v701 = vsel %vm578, %v540, 0.0
    %v702 = vsel %vm578, %v542, 0.0
    %v703 = vsel %vm578, %v544, 0.0
    %v704 = vsel %vm578, %v546, 0.0
    %v705 = vsel %vm578, %v548, 0.0
    %v706 = vsel %vm578, %v550, 0.0
    %v707 = vsel %vm578, %v552, 0.0
    %v708 = vsel %vm578, %v553, 0.0
    %v709 = vsel %vm578, %v509, 0.0
    %v710 = vsel %vm669, %v624, 0.0
    %v711 = vsel %vm669, %v626, 0.0
    %v712 = vsel %vm669, %v628, 0.0
    %v713 = vsel %vm669, %v630, 0.0
    %v714 = vsel %vm669, %v632, 0.0
    %v715 = vsel %vm669, %v634, 0.0
    %v716 = vsel %vm669, %v636, 0.0
    %v717 = vsel %vm669, %v638, 0.0
    %v718 = vsel %vm669, %v640, 0.0
    %v719 = vsel %vm669, %v642, 0.0
    %v720 = vsel %vm669, %v644, 0.0
    %v721 = vsel %vm669, %v646, 0.0
    %v722 = vsel %vm669, %v648, 0.0
    %v723 = vsel %vm669, %v650, 0.0
    %v724 = vsel %vm669, %v651, 0.0
    %v725 = vsel %vm669, %v668, 0.0
    %vm726 = vcmp.lt.s32.totalorder %v496, 56
    %vm727 = vcmp.lt.s32.totalorder %v497, 56
    %vm728 = vcmp.lt.s32.totalorder %v498, 56
    %vm729 = vcmp.lt.s32.totalorder %v499, 56
    %vm730 = vcmp.lt.s32.totalorder %v500, 56
    %vm731 = vcmp.lt.s32.totalorder %v501, 56
    %vm732 = vcmp.lt.s32.totalorder %v502, 56
    %vm733 = vcmp.lt.s32.totalorder %v503, 56
    %vm734 = vmand %vm726, %vm578
    %vm735 = vmand %vm727, %vm578
    %vm736 = vmand %vm728, %vm578
    %vm737 = vmand %vm729, %vm578
    %vm738 = vmand %vm730, %vm578
    %vm739 = vmand %vm731, %vm578
    %vm740 = vmand %vm732, %vm578
    %vm741 = vmand %vm733, %vm578
    %v742 = vsel %vm734, %v528, 0.0
    %v743 = vsel %vm735, %v530, 0.0
    %v744 = vsel %vm736, %v532, 0.0
    %v745 = vsel %vm737, %v534, 0.0
    %v746 = vsel %vm738, %v536, 0.0
    %v747 = vsel %vm739, %v538, 0.0
    %v748 = vsel %vm740, %v540, 0.0
    %v749 = vsel %vm741, %v542, 0.0
    %v750 = vsel %vm734, %v544, 0.0
    %v751 = vsel %vm735, %v546, 0.0
    %v752 = vsel %vm736, %v548, 0.0
    %v753 = vsel %vm737, %v550, 0.0
    %v754 = vsel %vm738, %v552, 0.0
    %v755 = vsel %vm739, %v553, 0.0
    %v756 = vsel %vm740, %v509, 0.0
    %v757 = vsel %vm741, %v569, 0.0
    %v758 = vsel %vm726, %v480, 0.0
    %v759 = vsel %vm727, %v481, 0.0
    %v760 = vsel %vm728, %v482, 0.0
    %v761 = vsel %vm729, %v483, 0.0
    %v762 = vsel %vm730, %v484, 0.0
    %v763 = vsel %vm731, %v485, 0.0
    %v764 = vsel %vm732, %v486, 0.0
    %v765 = vsel %vm733, %v487, 0.0
    %v766 = vsel %vm726, %v488, 0.0
    %v767 = vsel %vm727, %v489, 0.0
    %v768 = vsel %vm728, %v490, 0.0
    %v769 = vsel %vm729, %v491, 0.0
    %v770 = vsel %vm730, %v492, 0.0
    %v771 = vsel %vm731, %v493, 0.0
    %v772 = vsel %vm732, %v494, 0.0
    %v773 = vsel %vm733, %v479, 0.0
    %vm774 = vmand %vm726, %vm669
    %vm775 = vmand %vm727, %vm669
    %vm776 = vmand %vm728, %vm669
    %vm777 = vmand %vm729, %vm669
    %vm778 = vmand %vm730, %vm669
    %vm779 = vmand %vm731, %vm669
    %vm780 = vmand %vm732, %vm669
    %vm781 = vmand %vm733, %vm669
    %v782 = vsel %vm774, %v626, 0.0
    %v783 = vsel %vm775, %v628, 0.0
    %v784 = vsel %vm776, %v630, 0.0
    %v785 = vsel %vm777, %v632, 0.0
    %v786 = vsel %vm778, %v634, 0.0
    %v787 = vsel %vm779, %v636, 0.0
    %v788 = vsel %vm780, %v638, 0.0
    %v789 = vsel %vm781, %v640, 0.0
    %v790 = vsel %vm774, %v642, 0.0
    %v791 = vsel %vm775, %v644, 0.0
    %v792 = vsel %vm776, %v646, 0.0
    %v793 = vsel %vm777, %v648, 0.0
    %v794 = vsel %vm778, %v650, 0.0
    %v795 = vsel %vm779, %v651, 0.0
    %v796 = vsel %vm780, %v668, 0.0
    %v797 = vsel %vm781, %v624, 0.0
    %v798 = vld [vmem:[#allocation10] sm:$0xff]
    %v799 = vld [vmem:[#allocation10 + $0x8] sm:$0xff]
    %v800 = vld [vmem:[#allocation10 + $0x10] sm:$0xff]
    %v801 = vld [vmem:[#allocation10 + $0x18] sm:$0xff]
    %v802 = vld [vmem:[#allocation10 + $0x20] sm:$0xff]
    %v803 = vld [vmem:[#allocation10 + $0x28] sm:$0xff]
    %v804 = vld [vmem:[#allocation10 + $0x30] sm:$0xff]
    %v805 = vld [vmem:[#allocation10 + $0x38] sm:$0xff]
    %v806 = vld [vmem:[#allocation10 + $0x40] sm:$0xff]
    %v807 = vld [vmem:[#allocation10 + $0x48] sm:$0xff]
    %v808 = vld [vmem:[#allocation10 + $0x50] sm:$0xff]
    %v809 = vld [vmem:[#allocation10 + $0x58] sm:$0xff]
    %v810 = vld [vmem:[#allocation10 + $0x60] sm:$0xff]
    %v811 = vld [vmem:[#allocation10 + $0x68] sm:$0xff]
    %v812 = vld [vmem:[#allocation10 + $0x70] sm:$0xff]
    %v813 = vld [vmem:[#allocation10 + $0x78] sm:$0xff]
    %v814 = vld [vmem:[#allocation10 + $0x80] sm:$0xff]
    %v815 = vld [vmem:[#allocation10 + $0x88] sm:$0xff]
    %v816 = vld [vmem:[#allocation10 + $0x90] sm:$0xff]
    %v817 = vld [vmem:[#allocation10 + $0x98] sm:$0xff]
    %v818 = vld [vmem:[#allocation10 + $0xa0] sm:$0xff]
    %v819 = vld [vmem:[#allocation10 + $0xa8] sm:$0xff]
    %v820 = vld [vmem:[#allocation10 + $0xb0] sm:$0xff]
    %v821 = vld [vmem:[#allocation10 + $0xb8] sm:$0xff]
    %v822 = vld [vmem:[#allocation10 + $0xc0] sm:$0xff]
    %v823 = vld [vmem:[#allocation10 + $0xc8] sm:$0xff]
    %v824 = vld [vmem:[#allocation10 + $0xd0] sm:$0xff]
    %v825 = vld [vmem:[#allocation10 + $0xd8] sm:$0xff]
    %v826 = vld [vmem:[#allocation10 + $0xe0] sm:$0xff]
    %v827 = vld [vmem:[#allocation10 + $0xe8] sm:$0xff]
    %v828 = vld [vmem:[#allocation10 + $0xf0] sm:$0xff]
    %v829 = vld [vmem:[#allocation10 + $0xf8] sm:$0xff]
    %v830 = vld [vmem:[#allocation10 + $0x100] sm:$0xff]
    %v831 = vld [vmem:[#allocation10 + $0x108] sm:$0xff]
    %v832 = vld [vmem:[#allocation10 + $0x110] sm:$0xff]
    %v833 = vld [vmem:[#allocation10 + $0x118] sm:$0xff]
    %v834 = vld [vmem:[#allocation10 + $0x120] sm:$0xff]
    %v835 = vld [vmem:[#allocation10 + $0x128] sm:$0xff]
    %v836 = vld [vmem:[#allocation10 + $0x130] sm:$0xff]
    %v837 = vld [vmem:[#allocation10 + $0x138] sm:$0xff]
    %v838 = vld [vmem:[#allocation10 + $0x140] sm:$0xff]
    %v839 = vld [vmem:[#allocation10 + $0x148] sm:$0xff]
    %v840 = vld [vmem:[#allocation10 + $0x150] sm:$0xff]
    %v841 = vld [vmem:[#allocation10 + $0x158] sm:$0xff]
    %v842 = vld [vmem:[#allocation10 + $0x160] sm:$0xff]
    %v843 = vld [vmem:[#allocation10 + $0x168] sm:$0xff]
    %v844 = vld [vmem:[#allocation10 + $0x170] sm:$0xff]
    %v845 = vld [vmem:[#allocation10 + $0x178] sm:$0xff]
    %v846 = vld [vmem:[#allocation10 + $0x180] sm:$0xff]
    %v847 = vld [vmem:[#allocation10 + $0x188] sm:$0xff]
    %v848 = vld [vmem:[#allocation10 + $0x190] sm:$0xff]
    %v849 = vld [vmem:[#allocation10 + $0x198] sm:$0xff]
    %v850 = vld [vmem:[#allocation10 + $0x1a0] sm:$0xff]
    %v851 = vld [vmem:[#allocation10 + $0x1a8] sm:$0xff]
    %v852 = vld [vmem:[#allocation10 + $0x1b0] sm:$0xff]
    %v853 = vld [vmem:[#allocation10 + $0x1b8] sm:$0xff]
    %v854 = vld [vmem:[#allocation10 + $0x1c0] sm:$0xff]
    %v855 = vld [vmem:[#allocation10 + $0x1c8] sm:$0xff]
    %v856 = vld [vmem:[#allocation10 + $0x1d0] sm:$0xff]
    %v857 = vld [vmem:[#allocation10 + $0x1d8] sm:$0xff]
    %v858 = vld [vmem:[#allocation10 + $0x1e0] sm:$0xff]
    %v859 = vld [vmem:[#allocation10 + $0x1e8] sm:$0xff]
    %v860 = vld [vmem:[#allocation10 + $0x1f0] sm:$0xff]
    %v861 = vld [vmem:[#allocation10 + $0x1f8] sm:$0xff]
    %v862 = vld [vmem:[#allocation10 + $0x200] sm:$0xff]
    %v863 = vld [vmem:[#allocation10 + $0x208] sm:$0xff]
    %v864 = vld [vmem:[#allocation10 + $0x210] sm:$0xff]
    %v865 = vld [vmem:[#allocation10 + $0x218] sm:$0xff]
    %v866 = vld [vmem:[#allocation10 + $0x220] sm:$0xff]
    %v867 = vld [vmem:[#allocation10 + $0x228] sm:$0xff]
    %v868 = vld [vmem:[#allocation10 + $0x230] sm:$0xff]
    %v869 = vld [vmem:[#allocation10 + $0x238] sm:$0xff]
    %v870 = vld [vmem:[#allocation10 + $0x240] sm:$0xff]
    %v871 = vld [vmem:[#allocation10 + $0x248] sm:$0xff]
    %v872 = vld [vmem:[#allocation10 + $0x250] sm:$0xff]
    %v873 = vld [vmem:[#allocation10 + $0x258] sm:$0xff]
    %v874 = vld [vmem:[#allocation10 + $0x260] sm:$0xff]
    %v875 = vld [vmem:[#allocation10 + $0x268] sm:$0xff]
    %v876 = vld [vmem:[#allocation10 + $0x270] sm:$0xff]
    %v877 = vld [vmem:[#allocation10 + $0x278] sm:$0xff]
    %v878 = vld [vmem:[#allocation10 + $0x280] sm:$0xff]
    %v879 = vld [vmem:[#allocation10 + $0x288] sm:$0xff]
    %v880 = vld [vmem:[#allocation10 + $0x290] sm:$0xff]
    %v881 = vld [vmem:[#allocation10 + $0x298] sm:$0xff]
    %v882 = vld [vmem:[#allocation10 + $0x2a0] sm:$0xff]
    %v883 = vld [vmem:[#allocation10 + $0x2a8] sm:$0xff]
    %v884 = vld [vmem:[#allocation10 + $0x2b0] sm:$0xff]
    %v885 = vld [vmem:[#allocation10 + $0x2b8] sm:$0xff]
    %v886 = vld [vmem:[#allocation10 + $0x2c0] sm:$0xff]
    %v887 = vld [vmem:[#allocation10 + $0x2c8] sm:$0xff]
    %v888 = vld [vmem:[#allocation10 + $0x2d0] sm:$0xff]
    %v889 = vld [vmem:[#allocation10 + $0x2d8] sm:$0xff]
    %v890 = vld [vmem:[#allocation10 + $0x2e0] sm:$0xff]
    %v891 = vld [vmem:[#allocation10 + $0x2e8] sm:$0xff]
    %v892 = vld [vmem:[#allocation10 + $0x2f0] sm:$0xff]
    %v893 = vld [vmem:[#allocation10 + $0x2f8] sm:$0xff]
    %v894 = vld [vmem:[#allocation10 + $0x300] sm:$0xff]
    %v895 = vld [vmem:[#allocation10 + $0x308] sm:$0xff]
    %v896 = vld [vmem:[#allocation10 + $0x310] sm:$0xff]
    %v897 = vld [vmem:[#allocation10 + $0x318] sm:$0xff]
    %v898 = vld [vmem:[#allocation10 + $0x320] sm:$0xff]
    %v899 = vld [vmem:[#allocation10 + $0x328] sm:$0xff]
    %v900 = vld [vmem:[#allocation10 + $0x330] sm:$0xff]
    %v901 = vld [vmem:[#allocation10 + $0x338] sm:$0xff]
    %v902 = vld [vmem:[#allocation10 + $0x340] sm:$0xff]
    %v903 = vld [vmem:[#allocation10 + $0x348] sm:$0xff]
    %v904 = vld [vmem:[#allocation10 + $0x350] sm:$0xff]
    %v905 = vld [vmem:[#allocation10 + $0x358] sm:$0xff]
    %v906 = vld [vmem:[#allocation10 + $0x360] sm:$0xff]
    %v907 = vld [vmem:[#allocation10 + $0x368] sm:$0xff]
    %v908 = vld [vmem:[#allocation10 + $0x370] sm:$0xff]
    %v909 = vld [vmem:[#allocation10 + $0x378] sm:$0xff]
    %v910 = vld [vmem:[#allocation10 + $0x380] sm:$0xff]
    %v911 = vld [vmem:[#allocation10 + $0x388] sm:$0xff]
    %v912 = vld [vmem:[#allocation10 + $0x390] sm:$0xff]
    %v913 = vld [vmem:[#allocation10 + $0x398] sm:$0xff]
    %v914 = vld [vmem:[#allocation10 + $0x3a0] sm:$0xff]
    %v915 = vld [vmem:[#allocation10 + $0x3a8] sm:$0xff]
    %v916 = vld [vmem:[#allocation10 + $0x3b0] sm:$0xff]
    %v917 = vld [vmem:[#allocation10 + $0x3b8] sm:$0xff]
    %v918 = vld [vmem:[#allocation10 + $0x3c0] sm:$0xff]
    %v919 = vld [vmem:[#allocation10 + $0x3c8] sm:$0xff]
    %v920 = vld [vmem:[#allocation10 + $0x3d0] sm:$0xff]
    %v921 = vld [vmem:[#allocation10 + $0x3d8] sm:$0xff]
    %v922 = vld [vmem:[#allocation10 + $0x3e0] sm:$0xff]
    %v923 = vld [vmem:[#allocation10 + $0x3e8] sm:$0xff]
    %v924 = vld [vmem:[#allocation10 + $0x3f0] sm:$0xff]
    %v925 = vld [vmem:[#allocation10 + $0x3f8] sm:$0xff]
    %v926 = vld [vmem:[#allocation10 + $0x400] sm:$0xff]
    %v927 = vld [vmem:[#allocation10 + $0x408] sm:$0xff]
    %v928 = vld [vmem:[#allocation10 + $0x410] sm:$0xff]
    %v929 = vld [vmem:[#allocation10 + $0x418] sm:$0xff]
    %v930 = vld [vmem:[#allocation10 + $0x420] sm:$0xff]
    %v931 = vld [vmem:[#allocation10 + $0x428] sm:$0xff]
    %v932 = vld [vmem:[#allocation10 + $0x430] sm:$0xff]
    %v933 = vld [vmem:[#allocation10 + $0x438] sm:$0xff]
    %v934 = vld [vmem:[#allocation10 + $0x440] sm:$0xff]
    %v935 = vld [vmem:[#allocation10 + $0x448] sm:$0xff]
    %v936 = vld [vmem:[#allocation10 + $0x450] sm:$0xff]
    %v937 = vld [vmem:[#allocation10 + $0x458] sm:$0xff]
    %v938 = vld [vmem:[#allocation10 + $0x460] sm:$0xff]
    %v939 = vld [vmem:[#allocation10 + $0x468] sm:$0xff]
    %v940 = vld [vmem:[#allocation10 + $0x470] sm:$0xff]
    %v941 = vld [vmem:[#allocation10 + $0x478] sm:$0xff]
    %942 = vmatprep.subr.mxu0 0.0
    %943 = vmatpush1.msra.mxu0 %v798
    %944 = vmatprep.subr.mxu0 0.0
    %945 = vmatpush1.msra.mxu0 %v799
    %946 = vmatprep.subr.mxu0 0.0
    %947 = vmatpush1.msra.mxu0 %v800
    %948 = vmatprep.subr.mxu0 0.0
    %949 = vmatpush1.msra.mxu0 %v801
    %950 = vmatprep.subr.mxu0 0.0
    %951 = vmatpush1.msra.mxu0 %v802
    %952 = vmatprep.subr.mxu0 0.0
    %953 = vmatpush1.msra.mxu0 %v803
    %954 = vmatprep.subr.mxu0 0.0
    %955 = vmatpush1.msra.mxu0 %v804
    %956 = vmatprep.subr.mxu0 0.0
    %957 = vmatpush1.msra.mxu0 %v805
    %958 = vmatprep.subr.mxu0 0.0
    %959 = vmatpush1.msra.mxu0 %v806
    %960 = vmatprep.subr.mxu0 0.0
    %961 = vmatpush1.msra.mxu0 %v807
    %962 = vmatprep.subr.mxu0 0.0
    %963 = vmatpush1.msra.mxu0 %v808
    %964 = vmatprep.subr.mxu0 0.0
    %965 = vmatpush1.msra.mxu0 %v809
    %966 = vmatprep.subr.mxu0 0.0
    %967 = vmatpush1.msra.mxu0 %v810
    %968 = vmatprep.subr.mxu0 0.0
    %969 = vmatpush1.msra.mxu0 %v811
    %970 = vmatprep.subr.mxu0 0.0
    %971 = vmatpush1.msra.mxu0 %v812
    %972 = vmatprep.subr.mxu0 0.0
    %973 = vmatpush1.msra.mxu0 %v813
    %974 = vmatprep.subr.mxu0 0.0
    %975 = vmatpush1.msra.mxu0 %v814
    %976 = vmatprep.subr.mxu0 0.0
    %977 = vmatpush1.msra.mxu0 %v815
    %978 = vmatprep.subr.mxu0 0.0
    %979 = vmatpush1.msra.mxu0 %v816
    %980 = vmatprep.subr.mxu0 0.0
    %981 = vmatpush1.msra.mxu0 %v817
    %982 = vmatprep.subr.mxu0 0.0
    %983 = vmatpush1.msra.mxu0 %v818
    %984 = vmatprep.subr.mxu0 0.0
    %985 = vmatpush1.msra.mxu0 %v819
    %986 = vmatprep.subr.mxu0 0.0
    %987 = vmatpush1.msra.mxu0 %v820
    %988 = vmatprep.subr.mxu0 0.0
    %989 = vmatpush1.msra.mxu0 %v821
    %990 = vmatprep.subr.mxu0 0.0
    %991 = vmatpush1.msra.mxu0 %v822
    %992 = vmatprep.subr.mxu0 0.0
    %993 = vmatpush1.msra.mxu0 %v823
    %994 = vmatprep.subr.mxu0 0.0
    %995 = vmatpush1.msra.mxu0 %v824
    %996 = vmatprep.subr.mxu0 0.0
    %997 = vmatpush1.msra.mxu0 %v825
    %998 = vmatprep.subr.mxu0 0.0
    %999 = vmatpush1.msra.mxu0 %v826
    %1000 = vmatprep.subr.mxu0 0.0
    %1001 = vmatpush1.msra.mxu0 %v827
    %1002 = vmatprep.subr.mxu0 0.0
    %1003 = vmatpush1.msra.mxu0 %v828
    %1004 = vmatprep.subr.mxu0 0.0
    %1005 = vmatpush1.msra.mxu0 %v829
    %1006 = vmatprep.mubr.f32.mxu0 %v603
    %1007 = vmatmul.mubr.f32.gmra.mrb[0].mxu0 %v587
    %v1008 = vpop.f32.mrb[0].mxu0
    %v1009 = vadd.f32 0.0, %v1008
    %v1010 = vpop.f32.mrb[0].mxu0
    %1011 = vmatprep.mubr.f32.mxu0 %v604
    %1012 = vmatmul.mubr.f32.gmra.mrb[0].mxu0 %v588
    %v1013 = vpop.f32.mrb[0].mxu0
    %v1014 = vadd.f32 0.0, %v1013
    %v1015 = vpop.f32.mrb[0].mxu0
    %1016 = vmatprep.mubr.f32.mxu0 %v605
    %1017 = vmatmul.mubr.f32.gmra.mrb[0].mxu0 %v589
    %v1018 = vpop.f32.mrb[0].mxu0
    %v1019 = vadd.f32 0.0, %v1018
    %v1020 = vpop.f32.mrb[0].mxu0
    %1021 = vmatprep.mubr.f32.mxu0 %v606
    %1022 = vmatmul.mubr.f32.gmra.mrb[0].mxu0 %v590
    %v1023 = vpop.f32.mrb[0].mxu0
    %v1024 = vadd.f32 0.0, %v1023
    %v1025 = vpop.f32.mrb[0].mxu0
    %1026 = vmatprep.mubr.f32.mxu0 %v607
    %1027 = vmatmul.mubr.f32.gmra.mrb[0].mxu0 %v591
    %v1028 = vpop.f32.mrb[0].mxu0
    %v1029 = vadd.f32 0.0, %v1028
    %v1030 = vpop.f32.mrb[0].mxu0
    %1031 = vmatprep.mubr.f32.mxu0 %v608
    %1032 = vmatmul.mubr.f32.gmra.mrb[0].mxu0 %v592
    %v1033 = vpop.f32.mrb[0].mxu0
    %v1034 = vadd.f32 0.0, %v1033
    %v1035 = vpop.f32.mrb[0].mxu0
    %1036 = vmatprep.mubr.f32.mxu0 %v609
    %1037 = vmatmul.mubr.f32.gmra.mrb[0].mxu0 %v593
    %v1038 = vpop.f32.mrb[0].mxu0
    %v1039 = vadd.f32 0.0, %v1038
    %v1040 = vpop.f32.mrb[0].mxu0
    %1041 = vmatprep.mubr.f32.mxu0 %v610
    %1042 = vmatmul.mubr.f32.gmra.mrb[0].mxu0 %v594
    %v1043 = vpop.f32.mrb[0].mxu0
    %v1044 = vadd.f32 0.0, %v1043
    %v1045 = vpop.f32.mrb[0].mxu0
    %1046 = vmatprep.mubr.f32.mxu0 %v611
    %1047 = vmatmul.mubr.f32.gmra.mrb[0].mxu0 %v595
    %v1048 = vpop.f32.mrb[0].mxu0
    %v1049 = vadd.f32 0.0, %v1048
    %v1050 = vpop.f32.mrb[0].mxu0
    %1051 = vmatprep.mubr.f32.mxu0 %v612
    %1052 = vmatmul.mubr.f32.gmra.mrb[0].mxu0 %v596
    %v1053 = vpop.f32.mrb[0].mxu0
    %v1054 = vadd.f32 0.0, %v1053
    %v1055 = vpop.f32.mrb[0].mxu0
    %1056 = vmatprep.mubr.f32.mxu0 %v613
    %1057 = vmatmul.mubr.f32.gmra.mrb[0].mxu0 %v597
    %v1058 = vpop.f32.mrb[0].mxu0
    %v1059 = vadd.f32 0.0, %v1058
    %v1060 = vpop.f32.mrb[0].mxu0
    %1061 = vmatprep.mubr.f32.mxu0 %v614
    %1062 = vmatmul.mubr.f32.gmra.mrb[0].mxu0 %v598
    %v1063 = vpop.f32.mrb[0].mxu0
    %v1064 = vadd.f32 0.0, %v1063
    %v1065 = vpop.f32.mrb[0].mxu0
    %1066 = vmatprep.mubr.f32.mxu0 %v615
    %1067 = vmatmul.mubr.f32.gmra.mrb[0].mxu0 %v599
    %v1068 = vpop.f32.mrb[0].mxu0
    %v1069 = vadd.f32 0.0, %v1068
    %v1070 = vpop.f32.mrb[0].mxu0
    %1071 = vmatprep.mubr.f32.mxu0 %v616
    %1072 = vmatmul.mubr.f32.gmra.mrb[0].mxu0 %v600
    %v1073 = vpop.f32.mrb[0].mxu0
    %v1074 = vadd.f32 0.0, %v1073
    %v1075 = vpop.f32.mrb[0].mxu0
    %1076 = vmatprep.mubr.f32.mxu0 %v617
    %1077 = vmatmul.mubr.f32.gmra.mrb[0].mxu0 %v601
    %v1078 = vpop.f32.mrb[0].mxu0
    %v1079 = vadd.f32 0.0, %v1078
    %v1080 = vpop.f32.mrb[0].mxu0
    %1081 = vmatprep.mubr.f32.mxu0 %v618
    %1082 = vmatmul.mubr.f32.gmra.mrb[0].mxu0 %v602
    %v1083 = vpop.f32.mrb[0].mxu0
    %v1084 = vadd.f32 0.0, %v1083
    %v1085 = vpop.f32.mrb[0].mxu0
    %1086 = vdwg.mxu0
    %1087 = vmatprep.subr.mxu0 0.0
    %1088 = vmatpush1.msra.mxu0 %v830
    %1089 = vmatprep.subr.mxu0 0.0
    %1090 = vmatpush1.msra.mxu0 %v831
    %1091 = vmatprep.subr.mxu0 0.0
    %1092 = vmatpush1.msra.mxu0 %v832
    %1093 = vmatprep.subr.mxu0 0.0
    %1094 = vmatpush1.msra.mxu0 %v833
    %1095 = vmatprep.subr.mxu0 0.0
    %1096 = vmatpush1.msra.mxu0 %v834
    %1097 = vmatprep.subr.mxu0 0.0
    %1098 = vmatpush1.msra.mxu0 %v835
    %1099 = vmatprep.subr.mxu0 0.0
    %1100 = vmatpush1.msra.mxu0 %v836
    %1101 = vmatprep.subr.mxu0 0.0
    %1102 = vmatpush1.msra.mxu0 %v837
    %1103 = vmatprep.subr.mxu0 0.0
    %1104 = vmatpush1.msra.mxu0 %v838
    %1105 = vmatprep.subr.mxu0 0.0
    %1106 = vmatpush1.msra.mxu0 %v839
    %1107 = vmatprep.subr.mxu0 0.0
    %1108 = vmatpush1.msra.mxu0 %v840
    %1109 = vmatprep.subr.mxu0 0.0
    %1110 = vmatpush1.msra.mxu0 %v841
    %1111 = vmatprep.subr.mxu0 0.0
    %1112 = vmatpush1.msra.mxu0 %v842
    %1113 = vmatprep.subr.mxu0 0.0
    %1114 = vmatpush1.msra.mxu0 %v843
    %1115 = vmatprep.subr.mxu0 0.0
    %1116 = vmatpush1.msra.mxu0 %v844
    %1117 = vmatprep.subr.mxu0 0.0
    %1118 = vmatpush1.msra.mxu0 %v845
    %1119 = vmatprep.subr.mxu0 0.0
    %1120 = vmatpush1.msra.mxu0 %v846
    %1121 = vmatprep.subr.mxu0 0.0
    %1122 = vmatpush1.msra.mxu0 %v847
    %1123 = vmatprep.subr.mxu0 0.0
    %1124 = vmatpush1.msra.mxu0 %v848
    %1125 = vmatprep.subr.mxu0 0.0
    %1126 = vmatpush1.msra.mxu0 %v849
    %1127 = vmatprep.subr.mxu0 0.0
    %1128 = vmatpush1.msra.mxu0 %v850
    %1129 = vmatprep.subr.mxu0 0.0
    %1130 = vmatpush1.msra.mxu0 %v851
    %1131 = vmatprep.subr.mxu0 0.0
    %1132 = vmatpush1.msra.mxu0 %v852
    %1133 = vmatprep.subr.mxu0 0.0
    %1134 = vmatpush1.msra.mxu0 %v853
    %1135 = vmatprep.subr.mxu0 0.0
    %1136 = vmatpush1.msra.mxu0 %v854
    %1137 = vmatprep.subr.mxu0 0.0
    %1138 = vmatpush1.msra.mxu0 %v855
    %1139 = vmatprep.subr.mxu0 0.0
    %1140 = vmatpush1.msra.mxu0 %v856
    %1141 = vmatprep.subr.mxu0 0.0
    %1142 = vmatpush1.msra.mxu0 %v857
    %1143 = vmatprep.subr.mxu0 0.0
    %1144 = vmatpush1.msra.mxu0 %v858
    %1145 = vmatprep.subr.mxu0 0.0
    %1146 = vmatpush1.msra.mxu0 %v859
    %1147 = vmatprep.subr.mxu0 0.0
    %1148 = vmatpush1.msra.mxu0 %v860
    %1149 = vmatprep.subr.mxu0 0.0
    %1150 = vmatpush1.msra.mxu0 %v861
    %1151 = vmatprep.mubr.f32.mxu0 %v694
    %1152 = vmatmul.mubr.f32.gmra.mrb[0].mxu0 %v678
    %v1153 = vpop.f32.mrb[0].mxu0
    %v1154 = vadd.f32 %v1009, %v1153
    %v1155 = vpop.f32.mrb[0].mxu0
    %1156 = vmatprep.mubr.f32.mxu0 %v695
    %1157 = vmatmul.mubr.f32.gmra.mrb[0].mxu0 %v679
    %v1158 = vpop.f32.mrb[0].mxu0
    %v1159 = vadd.f32 %v1014, %v1158
    %v1160 = vpop.f32.mrb[0].mxu0
    %1161 = vmatprep.mubr.f32.mxu0 %v696
    %1162 = vmatmul.mubr.f32.gmra.mrb[0].mxu0 %v680
    %v1163 = vpop.f32.mrb[0].mxu0
    %v1164 = vadd.f32 %v1019, %v1163
    %v1165 = vpop.f32.mrb[0].mxu0
    %1166 = vmatprep.mubr.f32.mxu0 %v697
    %1167 = vmatmul.mubr.f32.gmra.mrb[0].mxu0 %v681
    %v1168 = vpop.f32.mrb[0].mxu0
    %v1169 = vadd.f32 %v1024, %v1168
    %v1170 = vpop.f32.mrb[0].mxu0
    %1171 = vmatprep.mubr.f32.mxu0 %v698
    %1172 = vmatmul.mubr.f32.gmra.mrb[0].mxu0 %v682
    %v1173 = vpop.f32.mrb[0].mxu0
    %v1174 = vadd.f32 %v1029, %v1173
    %v1175 = vpop.f32.mrb[0].mxu0
    %1176 = vmatprep.mubr.f32.mxu0 %v699
    %1177 = vmatmul.mubr.f32.gmra.mrb[0].mxu0 %v683
    %v1178 = vpop.f32.mrb[0].mxu0
    %v1179 = vadd.f32 %v1034, %v1178
    %v1180 = vpop.f32.mrb[0].mxu0
    %1181 = vmatprep.mubr.f32.mxu0 %v700
    %1182 = vmatmul.mubr.f32.gmra.mrb[0].mxu0 %v684
    %v1183 = vpop.f32.mrb[0].mxu0
    %v1184 = vadd.f32 %v1039, %v1183
    %v1185 = vpop.f32.mrb[0].mxu0
    %1186 = vmatprep.mubr.f32.mxu0 %v701
    %1187 = vmatmul.mubr.f32.gmra.mrb[0].mxu0 %v685
    %v1188 = vpop.f32.mrb[0].mxu0
    %v1189 = vadd.f32 %v1044, %v1188
    %v1190 = vpop.f32.mrb[0].mxu0
    %1191 = vmatprep.mubr.f32.mxu0 %v702
    %1192 = vmatmul.mubr.f32.gmra.mrb[0].mxu0 %v686
    %v1193 = vpop.f32.mrb[0].mxu0
    %v1194 = vadd.f32 %v1049, %v1193
    %v1195 = vpop.f32.mrb[0].mxu0
    %1196 = vmatprep.mubr.f32.mxu0 %v703
    %1197 = vmatmul.mubr.f32.gmra.mrb[0].mxu0 %v687
    %v1198 = vpop.f32.mrb[0].mxu0
    %v1199 = vadd.f32 %v1054, %v1198
    %v1200 = vpop.f32.mrb[0].mxu0
    %1201 = vmatprep.mubr.f32.mxu0 %v704
    %1202 = vmatmul.mubr.f32.gmra.mrb[0].mxu0 %v688
    %v1203 = vpop.f32.mrb[0].mxu0
    %v1204 = vadd.f32 %v1059, %v1203
    %v1205 = vpop.f32.mrb[0].mxu0
    %1206 = vmatprep.mubr.f32.mxu0 %v705
    %1207 = vmatmul.mubr.f32.gmra.mrb[0].mxu0 %v689
    %v1208 = vpop.f32.mrb[0].mxu0
    %v1209 = vadd.f32 %v1064, %v1208
    %v1210 = vpop.f32.mrb[0].mxu0
    %1211 = vmatprep.mubr.f32.mxu0 %v706
    %1212 = vmatmul.mubr.f32.gmra.mrb[0].mxu0 %v690
    %v1213 = vpop.f32.mrb[0].mxu0
    %v1214 = vadd.f32 %v1069, %v1213
    %v1215 = vpop.f32.mrb[0].mxu0
    %1216 = vmatprep.mubr.f32.mxu0 %v707
    %1217 = vmatmul.mubr.f32.gmra.mrb[0].mxu0 %v691
    %v1218 = vpop.f32.mrb[0].mxu0
    %v1219 = vadd.f32 %v1074, %v1218
    %v1220 = vpop.f32.mrb[0].mxu0
    %1221 = vmatprep.mubr.f32.mxu0 %v708
    %1222 = vmatmul.mubr.f32.gmra.mrb[0].mxu0 %v692
    %v1223 = vpop.f32.mrb[0].mxu0
    %v1224 = vadd.f32 %v1079, %v1223
    %v1225 = vpop.f32.mrb[0].mxu0
    %1226 = vmatprep.mubr.f32.mxu0 %v709
    %1227 = vmatmul.mubr.f32.gmra.mrb[0].mxu0 %v693
    %v1228 = vpop.f32.mrb[0].mxu0
    %v1229 = vadd.f32 %v1084, %v1228
    %v1230 = vpop.f32.mrb[0].mxu0
    %1231 = vdwg.mxu0
    %1232 = vmatprep.subr.mxu0 0.0
    %1233 = vmatpush1.msra.mxu0 %v862
    %1234 = vmatprep.subr.mxu0 0.0
    %1235 = vmatpush1.msra.mxu0 %v863
    %1236 = vmatprep.subr.mxu0 0.0
    %1237 = vmatpush1.msra.mxu0 %v864
    %1238 = vmatprep.subr.mxu0 0.0
    %1239 = vmatpush1.msra.mxu0 %v865
    %1240 = vmatprep.subr.mxu0 0.0
    %1241 = vmatpush1.msra.mxu0 %v866
    %1242 = vmatprep.subr.mxu0 0.0
    %1243 = vmatpush1.msra.mxu0 %v867
    %1244 = vmatprep.subr.mxu0 0.0
    %1245 = vmatpush1.msra.mxu0 %v868
    %1246 = vmatprep.subr.mxu0 0.0
    %1247 = vmatpush1.msra.mxu0 %v869
    %1248 = vmatprep.subr.mxu0 0.0
    %1249 = vmatpush1.msra.mxu0 %v870
    %1250 = vmatprep.subr.mxu0 0.0
    %1251 = vmatpush1.msra.mxu0 %v871
    %1252 = vmatprep.subr.mxu0 0.0
    %1253 = vmatpush1.msra.mxu0 %v872
    %1254 = vmatprep.subr.mxu0 0.0
    %1255 = vmatpush1.msra.mxu0 %v873
    %1256 = vmatprep.subr.mxu0 0.0
    %1257 = vmatpush1.msra.mxu0 %v874
    %1258 = vmatprep.subr.mxu0 0.0
    %1259 = vmatpush1.msra.mxu0 %v875
    %1260 = vmatprep.subr.mxu0 0.0
    %1261 = vmatpush1.msra.mxu0 %v876
    %1262 = vmatprep.subr.mxu0 0.0
    %1263 = vmatpush1.msra.mxu0 %v877
    %1264 = vmatprep.subr.mxu0 0.0
    %1265 = vmatpush1.msra.mxu0 %v878
    %1266 = vmatprep.subr.mxu0 0.0
    %1267 = vmatpush1.msra.mxu0 %v879
    %1268 = vmatprep.subr.mxu0 0.0
    %1269 = vmatpush1.msra.mxu0 %v880
    %1270 = vmatprep.subr.mxu0 0.0
    %1271 = vmatpush1.msra.mxu0 %v881
    %1272 = vmatprep.subr.mxu0 0.0
    %1273 = vmatpush1.msra.mxu0 %v882
    %1274 = vmatprep.subr.mxu0 0.0
    %1275 = vmatpush1.msra.mxu0 %v883
    %1276 = vmatprep.subr.mxu0 0.0
    %1277 = vmatpush1.msra.mxu0 %v884
    %1278 = vmatprep.subr.mxu0 0.0
    %1279 = vmatpush1.msra.mxu0 %v885
    %1280 = vmatprep.subr.mxu0 0.0
    %1281 = vmatpush1.msra.mxu0 %v886
    %1282 = vmatprep.subr.mxu0 0.0
    %1283 = vmatpush1.msra.mxu0 %v887
    %1284 = vmatprep.subr.mxu0 0.0
    %1285 = vmatpush1.msra.mxu0 %v888
    %1286 = vmatprep.subr.mxu0 0.0
    %1287 = vmatpush1.msra.mxu0 %v889
    %1288 = vmatprep.subr.mxu0 0.0
    %1289 = vmatpush1.msra.mxu0 %v890
    %1290 = vmatprep.subr.mxu0 0.0
    %1291 = vmatpush1.msra.mxu0 %v891
    %1292 = vmatprep.subr.mxu0 0.0
    %1293 = vmatpush1.msra.mxu0 %v892
    %1294 = vmatprep.subr.mxu0 0.0
    %1295 = vmatpush1.msra.mxu0 %v893
    %1296 = vmatprep.mubr.f32.mxu0 %v710
    %1297 = vmatmul.mubr.f32.gmra.mrb[0].mxu0 %v479
    %v1298 = vpop.f32.mrb[0].mxu0
    %v1299 = vadd.f32 %v1154, %v1298
    %v1300 = vpop.f32.mrb[0].mxu0
    %1301 = vmatprep.mubr.f32.mxu0 %v711
    %1302 = vmatmul.mubr.f32.gmra.mrb[0].mxu0 %v480
    %v1303 = vpop.f32.mrb[0].mxu0
    %v1304 = vadd.f32 %v1159, %v1303
    %v1305 = vpop.f32.mrb[0].mxu0
    %1306 = vmatprep.mubr.f32.mxu0 %v712
    %1307 = vmatmul.mubr.f32.gmra.mrb[0].mxu0 %v481
    %v1308 = vpop.f32.mrb[0].mxu0
    %v1309 = vadd.f32 %v1164, %v1308
    %v1310 = vpop.f32.mrb[0].mxu0
    %1311 = vmatprep.mubr.f32.mxu0 %v713
    %1312 = vmatmul.mubr.f32.gmra.mrb[0].mxu0 %v482
    %v1313 = vpop.f32.mrb[0].mxu0
    %v1314 = vadd.f32 %v1169, %v1313
    %v1315 = vpop.f32.mrb[0].mxu0
    %1316 = vmatprep.mubr.f32.mxu0 %v714
    %1317 = vmatmul.mubr.f32.gmra.mrb[0].mxu0 %v483
    %v1318 = vpop.f32.mrb[0].mxu0
    %v1319 = vadd.f32 %v1174, %v1318
    %v1320 = vpop.f32.mrb[0].mxu0
    %1321 = vmatprep.mubr.f32.mxu0 %v715
    %1322 = vmatmul.mubr.f32.gmra.mrb[0].mxu0 %v484
    %v1323 = vpop.f32.mrb[0].mxu0
    %v1324 = vadd.f32 %v1179, %v1323
    %v1325 = vpop.f32.mrb[0].mxu0
    %1326 = vmatprep.mubr.f32.mxu0 %v716
    %1327 = vmatmul.mubr.f32.gmra.mrb[0].mxu0 %v485
    %v1328 = vpop.f32.mrb[0].mxu0
    %v1329 = vadd.f32 %v1184, %v1328
    %v1330 = vpop.f32.mrb[0].mxu0
    %1331 = vmatprep.mubr.f32.mxu0 %v717
    %1332 = vmatmul.mubr.f32.gmra.mrb[0].mxu0 %v486
    %v1333 = vpop.f32.mrb[0].mxu0
    %v1334 = vadd.f32 %v1189, %v1333
    %v1335 = vpop.f32.mrb[0].mxu0
    %1336 = vmatprep.mubr.f32.mxu0 %v718
    %1337 = vmatmul.mubr.f32.gmra.mrb[0].mxu0 %v487
    %v1338 = vpop.f32.mrb[0].mxu0
    %v1339 = vadd.f32 %v1194, %v1338
    %v1340 = vpop.f32.mrb[0].mxu0
    %1341 = vmatprep.mubr.f32.mxu0 %v719
    %1342 = vmatmul.mubr.f32.gmra.mrb[0].mxu0 %v488
    %v1343 = vpop.f32.mrb[0].mxu0
    %v1344 = vadd.f32 %v1199, %v1343
    %v1345 = vpop.f32.mrb[0].mxu0
    %1346 = vmatprep.mubr.f32.mxu0 %v720
    %1347 = vmatmul.mubr.f32.gmra.mrb[0].mxu0 %v489
    %v1348 = vpop.f32.mrb[0].mxu0
    %v1349 = vadd.f32 %v1204, %v1348
    %v1350 = vpop.f32.mrb[0].mxu0
    %1351 = vmatprep.mubr.f32.mxu0 %v721
    %1352 = vmatmul.mubr.f32.gmra.mrb[0].mxu0 %v490
    %v1353 = vpop.f32.mrb[0].mxu0
    %v1354 = vadd.f32 %v1209, %v1353
    %v1355 = vpop.f32.mrb[0].mxu0
    %1356 = vmatprep.mubr.f32.mxu0 %v722
    %1357 = vmatmul.mubr.f32.gmra.mrb[0].mxu0 %v491
    %v1358 = vpop.f32.mrb[0].mxu0
    %v1359 = vadd.f32 %v1214, %v1358
    %v1360 = vpop.f32.mrb[0].mxu0
    %1361 = vmatprep.mubr.f32.mxu0 %v723
    %1362 = vmatmul.mubr.f32.gmra.mrb[0].mxu0 %v492
    %v1363 = vpop.f32.mrb[0].mxu0
    %v1364 = vadd.f32 %v1219, %v1363
    %v1365 = vpop.f32.mrb[0].mxu0
    %1366 = vmatprep.mubr.f32.mxu0 %v724
    %1367 = vmatmul.mubr.f32.gmra.mrb[0].mxu0 %v493
    %v1368 = vpop.f32.mrb[0].mxu0
    %v1369 = vadd.f32 %v1224, %v1368
    %v1370 = vpop.f32.mrb[0].mxu0
    %1371 = vmatprep.mubr.f32.mxu0 %v725
    %1372 = vmatmul.mubr.f32.gmra.mrb[0].mxu0 %v494
    %v1373 = vpop.f32.mrb[0].mxu0
    %v1374 = vadd.f32 %v1229, %v1373
    %v1375 = vpop.f32.mrb[0].mxu0
    %1376 = vdwg.mxu0
    %1377 = vmatprep.subr.mxu0 0.0
    %1378 = vmatpush1.msra.mxu0 %v894
    %1379 = vmatprep.subr.mxu0 0.0
    %1380 = vmatpush1.msra.mxu0 %v895
    %1381 = vmatprep.subr.mxu0 0.0
    %1382 = vmatpush1.msra.mxu0 %v896
    %1383 = vmatprep.subr.mxu0 0.0
    %1384 = vmatpush1.msra.mxu0 %v897
    %1385 = vmatprep.subr.mxu0 0.0
    %1386 = vmatpush1.msra.mxu0 %v898
    %1387 = vmatprep.subr.mxu0 0.0
    %1388 = vmatpush1.msra.mxu0 %v899
    %1389 = vmatprep.subr.mxu0 0.0
    %1390 = vmatpush1.msra.mxu0 %v900
    %1391 = vmatprep.subr.mxu0 0.0
    %1392 = vmatpush1.msra.mxu0 %v901
    %1393 = vmatprep.subr.mxu0 0.0
    %1394 = vmatpush1.msra.mxu0 %v902
    %1395 = vmatprep.subr.mxu0 0.0
    %1396 = vmatpush1.msra.mxu0 %v903
    %1397 = vmatprep.subr.mxu0 0.0
    %1398 = vmatpush1.msra.mxu0 %v904
    %1399 = vmatprep.subr.mxu0 0.0
    %1400 = vmatpush1.msra.mxu0 %v905
    %1401 = vmatprep.subr.mxu0 0.0
    %1402 = vmatpush1.msra.mxu0 %v906
    %1403 = vmatprep.subr.mxu0 0.0
    %1404 = vmatpush1.msra.mxu0 %v907
    %1405 = vmatprep.subr.mxu0 0.0
    %1406 = vmatpush1.msra.mxu0 %v908
    %1407 = vmatprep.subr.mxu0 0.0
    %1408 = vmatpush1.msra.mxu0 %v909
    %1409 = vmatprep.subr.mxu0 0.0
    %1410 = vmatpush1.msra.mxu0 %v910
    %1411 = vmatprep.subr.mxu0 0.0
    %1412 = vmatpush1.msra.mxu0 %v911
    %1413 = vmatprep.subr.mxu0 0.0
    %1414 = vmatpush1.msra.mxu0 %v912
    %1415 = vmatprep.subr.mxu0 0.0
    %1416 = vmatpush1.msra.mxu0 %v913
    %1417 = vmatprep.subr.mxu0 0.0
    %1418 = vmatpush1.msra.mxu0 %v914
    %1419 = vmatprep.subr.mxu0 0.0
    %1420 = vmatpush1.msra.mxu0 %v915
    %1421 = vmatprep.subr.mxu0 0.0
    %1422 = vmatpush1.msra.mxu0 %v916
    %1423 = vmatprep.subr.mxu0 0.0
    %1424 = vmatpush1.msra.mxu0 %v917
    %1425 = vmatprep.subr.mxu0 0.0
    %1426 = vmatpush1.msra.mxu0 %v918
    %1427 = vmatprep.subr.mxu0 0.0
    %1428 = vmatpush1.msra.mxu0 %v919
    %1429 = vmatprep.subr.mxu0 0.0
    %1430 = vmatpush1.msra.mxu0 %v920
    %1431 = vmatprep.subr.mxu0 0.0
    %1432 = vmatpush1.msra.mxu0 %v921
    %1433 = vmatprep.subr.mxu0 0.0
    %1434 = vmatpush1.msra.mxu0 %v922
    %1435 = vmatprep.subr.mxu0 0.0
    %1436 = vmatpush1.msra.mxu0 %v923
    %1437 = vmatprep.subr.mxu0 0.0
    %1438 = vmatpush1.msra.mxu0 %v924
    %1439 = vmatprep.subr.mxu0 0.0
    %1440 = vmatpush1.msra.mxu0 %v925
    %1441 = vmatprep.mubr.f32.mxu0 %v758
    %1442 = vmatmul.mubr.f32.gmra.mrb[0].mxu0 %v742
    %v1443 = vpop.f32.mrb[0].mxu0
    %v1444 = vadd.f32 %v1299, %v1443
    %v1445 = vpop.f32.mrb[0].mxu0
    %1446 = vmatprep.mubr.f32.mxu0 %v759
    %1447 = vmatmul.mubr.f32.gmra.mrb[0].mxu0 %v743
    %v1448 = vpop.f32.mrb[0].mxu0
    %v1449 = vadd.f32 %v1304, %v1448
    %v1450 = vpop.f32.mrb[0].mxu0
    %1451 = vmatprep.mubr.f32.mxu0 %v760
    %1452 = vmatmul.mubr.f32.gmra.mrb[0].mxu0 %v744
    %v1453 = vpop.f32.mrb[0].mxu0
    %v1454 = vadd.f32 %v1309, %v1453
    %v1455 = vpop.f32.mrb[0].mxu0
    %1456 = vmatprep.mubr.f32.mxu0 %v761
    %1457 = vmatmul.mubr.f32.gmra.mrb[0].mxu0 %v745
    %v1458 = vpop.f32.mrb[0].mxu0
    %v1459 = vadd.f32 %v1314, %v1458
    %v1460 = vpop.f32.mrb[0].mxu0
    %1461 = vmatprep.mubr.f32.mxu0 %v762
    %1462 = vmatmul.mubr.f32.gmra.mrb[0].mxu0 %v746
    %v1463 = vpop.f32.mrb[0].mxu0
    %v1464 = vadd.f32 %v1319, %v1463
    %v1465 = vpop.f32.mrb[0].mxu0
    %1466 = vmatprep.mubr.f32.mxu0 %v763
    %1467 = vmatmul.mubr.f32.gmra.mrb[0].mxu0 %v747
    %v1468 = vpop.f32.mrb[0].mxu0
    %v1469 = vadd.f32 %v1324, %v1468
    %v1470 = vpop.f32.mrb[0].mxu0
    %1471 = vmatprep.mubr.f32.mxu0 %v764
    %1472 = vmatmul.mubr.f32.gmra.mrb[0].mxu0 %v748
    %v1473 = vpop.f32.mrb[0].mxu0
    %v1474 = vadd.f32 %v1329, %v1473
    %v1475 = vpop.f32.mrb[0].mxu0
    %1476 = vmatprep.mubr.f32.mxu0 %v765
    %1477 = vmatmul.mubr.f32.gmra.mrb[0].mxu0 %v749
    %v1478 = vpop.f32.mrb[0].mxu0
    %v1479 = vadd.f32 %v1334, %v1478
    %v1480 = vpop.f32.mrb[0].mxu0
    %1481 = vmatprep.mubr.f32.mxu0 %v766
    %1482 = vmatmul.mubr.f32.gmra.mrb[0].mxu0 %v750
    %v1483 = vpop.f32.mrb[0].mxu0
    %v1484 = vadd.f32 %v1339, %v1483
    %v1485 = vpop.f32.mrb[0].mxu0
    %1486 = vmatprep.mubr.f32.mxu0 %v767
    %1487 = vmatmul.mubr.f32.gmra.mrb[0].mxu0 %v751
    %v1488 = vpop.f32.mrb[0].mxu0
    %v1489 = vadd.f32 %v1344, %v1488
    %v1490 = vpop.f32.mrb[0].mxu0
    %1491 = vmatprep.mubr.f32.mxu0 %v768
    %1492 = vmatmul.mubr.f32.gmra.mrb[0].mxu0 %v752
    %v1493 = vpop.f32.mrb[0].mxu0
    %v1494 = vadd.f32 %v1349, %v1493
    %v1495 = vpop.f32.mrb[0].mxu0
    %1496 = vmatprep.mubr.f32.mxu0 %v769
    %1497 = vmatmul.mubr.f32.gmra.mrb[0].mxu0 %v753
    %v1498 = vpop.f32.mrb[0].mxu0
    %v1499 = vadd.f32 %v1354, %v1498
    %v1500 = vpop.f32.mrb[0].mxu0
    %1501 = vmatprep.mubr.f32.mxu0 %v770
    %1502 = vmatmul.mubr.f32.gmra.mrb[0].mxu0 %v754
    %v1503 = vpop.f32.mrb[0].mxu0
    %v1504 = vadd.f32 %v1359, %v1503
    %v1505 = vpop.f32.mrb[0].mxu0
    %1506 = vmatprep.mubr.f32.mxu0 %v771
    %1507 = vmatmul.mubr.f32.gmra.mrb[0].mxu0 %v755
    %v1508 = vpop.f32.mrb[0].mxu0
    %v1509 = vadd.f32 %v1364, %v1508
    %v1510 = vpop.f32.mrb[0].mxu0
    %1511 = vmatprep.mubr.f32.mxu0 %v772
    %1512 = vmatmul.mubr.f32.gmra.mrb[0].mxu0 %v756
    %v1513 = vpop.f32.mrb[0].mxu0
    %v1514 = vadd.f32 %v1369, %v1513
    %v1515 = vpop.f32.mrb[0].mxu0
    %1516 = vmatprep.mubr.f32.mxu0 %v773
    %1517 = vmatmul.mubr.f32.gmra.mrb[0].mxu0 %v757
    %v1518 = vpop.f32.mrb[0].mxu0
    %v1519 = vadd.f32 %v1374, %v1518
    %v1520 = vpop.f32.mrb[0].mxu0
    %1521 = vdwg.mxu0
    %1522 = vmatprep.subr.mxu0 0.0
    %1523 = vmatpush1.msra.mxu0 %v926
    %1524 = vmatprep.subr.mxu0 0.0
    %1525 = vmatpush1.msra.mxu0 %v927
    %1526 = vmatprep.subr.mxu0 0.0
    %1527 = vmatpush1.msra.mxu0 %v928
    %1528 = vmatprep.subr.mxu0 0.0
    %1529 = vmatpush1.msra.mxu0 %v929
    %1530 = vmatprep.subr.mxu0 0.0
    %1531 = vmatpush1.msra.mxu0 %v930
    %1532 = vmatprep.subr.mxu0 0.0
    %1533 = vmatpush1.msra.mxu0 %v931
    %1534 = vmatprep.subr.mxu0 0.0
    %1535 = vmatpush1.msra.mxu0 %v932
    %1536 = vmatprep.subr.mxu0 0.0
    %1537 = vmatpush1.msra.mxu0 %v933
    %1538 = vmatprep.subr.mxu0 0.0
    %1539 = vmatpush1.msra.mxu0 %v934
    %1540 = vmatprep.subr.mxu0 0.0
    %1541 = vmatpush1.msra.mxu0 %v935
    %1542 = vmatprep.subr.mxu0 0.0
    %1543 = vmatpush1.msra.mxu0 %v936
    %1544 = vmatprep.subr.mxu0 0.0
    %1545 = vmatpush1.msra.mxu0 %v937
    %1546 = vmatprep.subr.mxu0 0.0
    %1547 = vmatpush1.msra.mxu0 %v938
    %1548 = vmatprep.subr.mxu0 0.0
    %1549 = vmatpush1.msra.mxu0 %v939
    %1550 = vmatprep.subr.mxu0 0.0
    %1551 = vmatpush1.msra.mxu0 %v940
    %1552 = vmatprep.subr.mxu0 0.0
    %1553 = vmatpush1.msra.mxu0 %v941
    %1554 = vmatprep.subr.mxu0 0.0
    %1555 = vmatpush1.msra.mxu0 0.0
    %1556 = vmatprep.subr.mxu0 0.0
    %1557 = vmatpush1.msra.mxu0 0.0
    %1558 = vmatprep.subr.mxu0 0.0
    %1559 = vmatpush1.msra.mxu0 0.0
    %1560 = vmatprep.subr.mxu0 0.0
    %1561 = vmatpush1.msra.mxu0 0.0
    %1562 = vmatprep.subr.mxu0 0.0
    %1563 = vmatpush1.msra.mxu0 0.0
    %1564 = vmatprep.subr.mxu0 0.0
    %1565 = vmatpush1.msra.mxu0 0.0
    %1566 = vmatprep.subr.mxu0 0.0
    %1567 = vmatpush1.msra.mxu0 0.0
    %1568 = vmatprep.subr.mxu0 0.0
    %1569 = vmatpush1.msra.mxu0 0.0
    %1570 = vmatprep.subr.mxu0 0.0
    %1571 = vmatpush1.msra.mxu0 0.0
    %1572 = vmatprep.subr.mxu0 0.0
    %1573 = vmatpush1.msra.mxu0 0.0
    %1574 = vmatprep.subr.mxu0 0.0
    %1575 = vmatpush1.msra.mxu0 0.0
    %1576 = vmatprep.subr.mxu0 0.0
    %1577 = vmatpush1.msra.mxu0 0.0
    %1578 = vmatprep.subr.mxu0 0.0
    %1579 = vmatpush1.msra.mxu0 0.0
    %1580 = vmatprep.subr.mxu0 0.0
    %1581 = vmatpush1.msra.mxu0 0.0
    %1582 = vmatprep.subr.mxu0 0.0
    %1583 = vmatpush1.msra.mxu0 0.0
    %1584 = vmatprep.subr.mxu0 0.0
    %1585 = vmatpush1.msra.mxu0 0.0
    %1586 = vmatprep.mubr.f32.mxu0 0.0
    %1587 = vmatmul.mubr.f32.gmra.mrb[0].mxu0 %v782
    %v1588 = vpop.f32.mrb[0].mxu0
    %v1589 = vadd.f32 %v1444, %v1588
    %v1590 = vpop.f32.mrb[0].mxu0
    %1591 = vmatprep.mubr.f32.mxu0 0.0
    %1592 = vmatmul.mubr.f32.gmra.mrb[0].mxu0 %v783
    %v1593 = vpop.f32.mrb[0].mxu0
    %v1594 = vadd.f32 %v1449, %v1593
    %v1595 = vpop.f32.mrb[0].mxu0
    %1596 = vmatprep.mubr.f32.mxu0 0.0
    %1597 = vmatmul.mubr.f32.gmra.mrb[0].mxu0 %v784
    %v1598 = vpop.f32.mrb[0].mxu0
    %v1599 = vadd.f32 %v1454, %v1598
    %v1600 = vpop.f32.mrb[0].mxu0
    %1601 = vmatprep.mubr.f32.mxu0 0.0
    %1602 = vmatmul.mubr.f32.gmra.mrb[0].mxu0 %v785
    %v1603 = vpop.f32.mrb[0].mxu0
    %v1604 = vadd.f32 %v1459, %v1603
    %v1605 = vpop.f32.mrb[0].mxu0
    %1606 = vmatprep.mubr.f32.mxu0 0.0
    %1607 = vmatmul.mubr.f32.gmra.mrb[0].mxu0 %v786
    %v1608 = vpop.f32.mrb[0].mxu0
    %v1609 = vadd.f32 %v1464, %v1608
    %v1610 = vpop.f32.mrb[0].mxu0
    %1611 = vmatprep.mubr.f32.mxu0 0.0
    %1612 = vmatmul.mubr.f32.gmra.mrb[0].mxu0 %v787
    %v1613 = vpop.f32.mrb[0].mxu0
    %v1614 = vadd.f32 %v1469, %v1613
    %v1615 = vpop.f32.mrb[0].mxu0
    %1616 = vmatprep.mubr.f32.mxu0 0.0
    %1617 = vmatmul.mubr.f32.gmra.mrb[0].mxu0 %v788
    %v1618 = vpop.f32.mrb[0].mxu0
    %v1619 = vadd.f32 %v1474, %v1618
    %v1620 = vpop.f32.mrb[0].mxu0
    %1621 = vmatprep.mubr.f32.mxu0 0.0
    %1622 = vmatmul.mubr.f32.gmra.mrb[0].mxu0 %v789
    %v1623 = vpop.f32.mrb[0].mxu0
    %v1624 = vadd.f32 %v1479, %v1623
    %v1625 = vpop.f32.mrb[0].mxu0
    %1626 = vmatprep.mubr.f32.mxu0 0.0
    %1627 = vmatmul.mubr.f32.gmra.mrb[0].mxu0 %v790
    %v1628 = vpop.f32.mrb[0].mxu0
    %v1629 = vadd.f32 %v1484, %v1628
    %v1630 = vpop.f32.mrb[0].mxu0
    %1631 = vmatprep.mubr.f32.mxu0 0.0
    %1632 = vmatmul.mubr.f32.gmra.mrb[0].mxu0 %v791
    %v1633 = vpop.f32.mrb[0].mxu0
    %v1634 = vadd.f32 %v1489, %v1633
    %v1635 = vpop.f32.mrb[0].mxu0
    %1636 = vmatprep.mubr.f32.mxu0 0.0
    %1637 = vmatmul.mubr.f32.gmra.mrb[0].mxu0 %v792
    %v1638 = vpop.f32.mrb[0].mxu0
    %v1639 = vadd.f32 %v1494, %v1638
    %v1640 = vpop.f32.mrb[0].mxu0
    %1641 = vmatprep.mubr.f32.mxu0 0.0
    %1642 = vmatmul.mubr.f32.gmra.mrb[0].mxu0 %v793
    %v1643 = vpop.f32.mrb[0].mxu0
    %v1644 = vadd.f32 %v1499, %v1643
    %v1645 = vpop.f32.mrb[0].mxu0
    %1646 = vmatprep.mubr.f32.mxu0 0.0
    %1647 = vmatmul.mubr.f32.gmra.mrb[0].mxu0 %v794
    %v1648 = vpop.f32.mrb[0].mxu0
    %v1649 = vadd.f32 %v1504, %v1648
    %v1650 = vpop.f32.mrb[0].mxu0
    %1651 = vmatprep.mubr.f32.mxu0 0.0
    %1652 = vmatmul.mubr.f32.gmra.mrb[0].mxu0 %v795
    %v1653 = vpop.f32.mrb[0].mxu0
    %v1654 = vadd.f32 %v1509, %v1653
    %v1655 = vpop.f32.mrb[0].mxu0
    %1656 = vmatprep.mubr.f32.mxu0 0.0
    %1657 = vmatmul.mubr.f32.gmra.mrb[0].mxu0 %v796
    %v1658 = vpop.f32.mrb[0].mxu0
    %v1659 = vadd.f32 %v1514, %v1658
    %v1660 = vpop.f32.mrb[0].mxu0
    %1661 = vmatprep.mubr.f32.mxu0 0.0
    %1662 = vmatmul.mubr.f32.gmra.mrb[0].mxu0 %v797
    %v1663 = vpop.f32.mrb[0].mxu0
    %v1664 = vadd.f32 %v1519, %v1663
    %v1665 = vpop.f32.mrb[0].mxu0
    %1666 = vdwg.mxu0
    %v1667 = vld [vmem:[#allocation11] sm:$0x1]
    %v1668 = vld [vmem:[#allocation13] sm:$0x1]
    %v1669 = vadd.f32 %v1589, %v1594
    %v1670 = vadd.f32 %v1669, %v1599
    %v1671 = vadd.f32 %v1670, %v1604
    %v1672 = vadd.f32 %v1671, %v1609
    %v1673 = vadd.f32 %v1672, %v1614
    %v1674 = vadd.f32 %v1673, %v1619
    %v1675 = vadd.f32 %v1674, %v1624
    %v1676 = vadd.f32 %v1675, %v1629
    %v1677 = vadd.f32 %v1676, %v1634
    %v1678 = vadd.f32 %v1677, %v1639
    %v1679 = vadd.f32 %v1678, %v1644
    %v1680 = vadd.f32 %v1679, %v1649
    %v1681 = vadd.f32 %v1680, %v1654
    %v1682 = vadd.f32 %v1681, %v1659
    %v1683 = vadd.f32 %v1682, %v1664
    %v1684 = vrot.slane %v1683, 4
    %v1685 = vadd.f32 %v1683, %v1684
    %v1686 = vrot.slane %v1685, 2
    %v1687 = vadd.f32 %v1685, %v1686
    %v1688 = vrot.slane %v1687, 1
    %v1689 = vadd.f32 %v1687, %v1688
    %v1690 = vmul.f32 %v1689, %v376
    %v1691 = vsub.f32 %v1589, %v1690
    %v1692 = vsub.f32 %v1594, %v1690
    %v1693 = vsub.f32 %v1599, %v1690
    %v1694 = vsub.f32 %v1604, %v1690
    %v1695 = vsub.f32 %v1609, %v1690
    %v1696 = vsub.f32 %v1614, %v1690
    %v1697 = vsub.f32 %v1619, %v1690
    %v1698 = vsub.f32 %v1624, %v1690
    %v1699 = vsub.f32 %v1629, %v1690
    %v1700 = vsub.f32 %v1634, %v1690
    %v1701 = vsub.f32 %v1639, %v1690
    %v1702 = vsub.f32 %v1644, %v1690
    %v1703 = vsub.f32 %v1649, %v1690
    %v1704 = vsub.f32 %v1654, %v1690
    %v1705 = vsub.f32 %v1659, %v1690
    %v1706 = vsub.f32 %v1664, %v1690
    %v1707 = vmul.f32 %v1691, %v1691
    %v1708 = vmul.f32 %v1692, %v1692
    %v1709 = vmul.f32 %v1693, %v1693
    %v1710 = vmul.f32 %v1694, %v1694
    %v1711 = vmul.f32 %v1695, %v1695
    %v1712 = vmul.f32 %v1696, %v1696
    %v1713 = vmul.f32 %v1697, %v1697
    %v1714 = vmul.f32 %v1698, %v1698
    %v1715 = vmul.f32 %v1699, %v1699
    %v1716 = vmul.f32 %v1700, %v1700
    %v1717 = vmul.f32 %v1701, %v1701
    %v1718 = vmul.f32 %v1702, %v1702
    %v1719 = vmul.f32 %v1703, %v1703
    %v1720 = vmul.f32 %v1704, %v1704
    %v1721 = vmul.f32 %v1705, %v1705
    %v1722 = vmul.f32 %v1706, %v1706
    %v1723 = vadd.f32 %v1707, %v1708
    %v1724 = vadd.f32 %v1723, %v1709
    %v1725 = vadd.f32 %v1724, %v1710
    %v1726 = vadd.f32 %v1725, %v1711
    %v1727 = vadd.f32 %v1726, %v1712
    %v1728 = vadd.f32 %v1727, %v1713
    %v1729 = vadd.f32 %v1728, %v1714
    %v1730 = vadd.f32 %v1729, %v1715
    %v1731 = vadd.f32 %v1730, %v1716
    %v1732 = vadd.f32 %v1731, %v1717
    %v1733 = vadd.f32 %v1732, %v1718
    %v1734 = vadd.f32 %v1733, %v1719
    %v1735 = vadd.f32 %v1734, %v1720
    %v1736 = vadd.f32 %v1735, %v1721
    %v1737 = vadd.f32 %v1736, %v1722
    %v1738 = vrot.slane %v1737, 4
    %v1739 = vadd.f32 %v1737, %v1738
    %v1740 = vrot.slane %v1739, 2
    %v1741 = vadd.f32 %v1739, %v1740
    %v1742 = vrot.slane %v1741, 1
    %v1743 = vadd.f32 %v1741, %v1742
    %v1744 = vmul.f32 %v1743, %v376
    %v1745 = vadd.f32 %v1744, 1e-05
    %v1746 = vrsqrt.pop %v1745
    %v1747 = vmul.f32 %v1667, %v1746
    %v1749 = vlaneseq
    %v1750 = vshrl.u32 %v1749, 7
    %v1751 = vsub.s32 0, %v1750
    %v1752 = vrot.slane %v1747, %v1751
    %v1754 = vmul.f32 %v1691, %v1752
    %v1755 = vmul.f32 %v1692, %v1752
    %v1756 = vmul.f32 %v1693, %v1752
    %v1757 = vmul.f32 %v1694, %v1752
    %v1758 = vmul.f32 %v1695, %v1752
    %v1759 = vmul.f32 %v1696, %v1752
    %v1760 = vmul.f32 %v1697, %v1752
    %v1761 = vmul.f32 %v1698, %v1752
    %v1762 = vmul.f32 %v1699, %v1752
    %v1763 = vmul.f32 %v1700, %v1752
    %v1764 = vmul.f32 %v1701, %v1752
    %v1765 = vmul.f32 %v1702, %v1752
    %v1766 = vmul.f32 %v1703, %v1752
    %v1767 = vmul.f32 %v1704, %v1752
    %v1768 = vmul.f32 %v1705, %v1752
    %v1769 = vmul.f32 %v1706, %v1752
    %v1771 = vlaneseq
    %v1772 = vshrl.u32 %v1771, 7
    %v1773 = vsub.s32 0, %v1772
    %v1774 = vrot.slane %v1668, %v1773
    %v1776 = vadd.f32 %v1754, %v1774
    %v1777 = vadd.f32 %v1755, %v1774
    %v1778 = vadd.f32 %v1756, %v1774
    %v1779 = vadd.f32 %v1757, %v1774
    %v1780 = vadd.f32 %v1758, %v1774
    %v1781 = vadd.f32 %v1759, %v1774
    %v1782 = vadd.f32 %v1760, %v1774
    %v1783 = vadd.f32 %v1761, %v1774
    %v1784 = vadd.f32 %v1762, %v1774
    %v1785 = vadd.f32 %v1763, %v1774
    %v1786 = vadd.f32 %v1764, %v1774
    %v1787 = vadd.f32 %v1765, %v1774
    %v1788 = vadd.f32 %v1766, %v1774
    %v1789 = vadd.f32 %v1767, %v1774
    %v1790 = vadd.f32 %v1768, %v1774
    %v1791 = vadd.f32 %v1769, %v1774
    %v1792 = vmax.f32 %v1776, 0.0
    %v1793 = vmax.f32 %v1777, 0.0
    %v1794 = vmax.f32 %v1778, 0.0
    %v1795 = vmax.f32 %v1779, 0.0
    %v1796 = vmax.f32 %v1780, 0.0
    %v1797 = vmax.f32 %v1781, 0.0
    %v1798 = vmax.f32 %v1782, 0.0
    %v1799 = vmax.f32 %v1783, 0.0
    %v1800 = vmax.f32 %v1784, 0.0
    %v1801 = vmax.f32 %v1785, 0.0
    %v1802 = vmax.f32 %v1786, 0.0
    %v1803 = vmax.f32 %v1787, 0.0
    %v1804 = vmax.f32 %v1788, 0.0
    %v1805 = vmax.f32 %v1789, 0.0
    %v1806 = vmax.f32 %v1790, 0.0
    %v1807 = vmax.f32 %v1791, 0.0
    %v1808 = vld [vmem:[#allocation14] sm:$0xff]
    %v1809 = vld [vmem:[#allocation14 + $0x8] sm:$0xff]
    %v1810 = vld [vmem:[#allocation14 + $0x10] sm:$0xff]
    %v1811 = vld [vmem:[#allocation14 + $0x18] sm:$0xff]
    %v1812 = vld [vmem:[#allocation14 + $0x20] sm:$0xff]
    %v1813 = vld [vmem:[#allocation14 + $0x28] sm:$0xff]
    %v1814 = vld [vmem:[#allocation14 + $0x30] sm:$0xff]
    %v1815 = vld [vmem:[#allocation14 + $0x38] sm:$0xff]
    %v1816 = vld [vmem:[#allocation14 + $0x40] sm:$0xff]
    %v1817 = vld [vmem:[#allocation14 + $0x48] sm:$0xff]
    %v1818 = vld [vmem:[#allocation14 + $0x50] sm:$0xff]
    %v1819 = vld [vmem:[#allocation14 + $0x58] sm:$0xff]
    %v1820 = vld [vmem:[#allocation14 + $0x60] sm:$0xff]
    %v1821 = vld [vmem:[#allocation14 + $0x68] sm:$0xff]
    %v1822 = vld [vmem:[#allocation14 + $0x70] sm:$0xff]
    %v1823 = vld [vmem:[#allocation14 + $0x78] sm:$0xff]
    %1824 = vmatprep.subr.mxu0 0.0
    %1825 = vmatpush1.msra.mxu0 %v1808
    %1826 = vmatprep.subr.mxu0 0.0
    %1827 = vmatpush1.msra.mxu0 %v1809
    %1828 = vmatprep.subr.mxu0 0.0
    %1829 = vmatpush1.msra.mxu0 %v1810
    %1830 = vmatprep.subr.mxu0 0.0
    %1831 = vmatpush1.msra.mxu0 %v1811
    %1832 = vmatprep.subr.mxu0 0.0
    %1833 = vmatpush1.msra.mxu0 %v1812
    %1834 = vmatprep.subr.mxu0 0.0
    %1835 = vmatpush1.msra.mxu0 %v1813
    %1836 = vmatprep.subr.mxu0 0.0
    %1837 = vmatpush1.msra.mxu0 %v1814
    %1838 = vmatprep.subr.mxu0 0.0
    %1839 = vmatpush1.msra.mxu0 %v1815
    %1840 = vmatprep.subr.mxu0 0.0
    %1841 = vmatpush1.msra.mxu0 %v1816
    %1842 = vmatprep.subr.mxu0 0.0
    %1843 = vmatpush1.msra.mxu0 %v1817
    %1844 = vmatprep.subr.mxu0 0.0
    %1845 = vmatpush1.msra.mxu0 %v1818
    %1846 = vmatprep.subr.mxu0 0.0
    %1847 = vmatpush1.msra.mxu0 %v1819
    %1848 = vmatprep.subr.mxu0 0.0
    %1849 = vmatpush1.msra.mxu0 %v1820
    %1850 = vmatprep.subr.mxu0 0.0
    %1851 = vmatpush1.msra.mxu0 %v1821
    %1852 = vmatprep.subr.mxu0 0.0
    %1853 = vmatpush1.msra.mxu0 %v1822
    %1854 = vmatprep.subr.mxu0 0.0
    %1855 = vmatpush1.msra.mxu0 %v1823
    %1856 = vmatprep.subr.mxu0 0.0
    %1857 = vmatpush1.msra.mxu0 0.0
    %1858 = vmatprep.subr.mxu0 0.0
    %1859 = vmatpush1.msra.mxu0 0.0
    %1860 = vmatprep.subr.mxu0 0.0
    %1861 = vmatpush1.msra.mxu0 0.0
    %1862 = vmatprep.subr.mxu0 0.0
    %1863 = vmatpush1.msra.mxu0 0.0
    %1864 = vmatprep.subr.mxu0 0.0
    %1865 = vmatpush1.msra.mxu0 0.0
    %1866 = vmatprep.subr.mxu0 0.0
    %1867 = vmatpush1.msra.mxu0 0.0
    %1868 = vmatprep.subr.mxu0 0.0
    %1869 = vmatpush1.msra.mxu0 0.0
    %1870 = vmatprep.subr.mxu0 0.0
    %1871 = vmatpush1.msra.mxu0 0.0
    %1872 = vmatprep.subr.mxu0 0.0
    %1873 = vmatpush1.msra.mxu0 0.0
    %1874 = vmatprep.subr.mxu0 0.0
    %1875 = vmatpush1.msra.mxu0 0.0
    %1876 = vmatprep.subr.mxu0 0.0
    %1877 = vmatpush1.msra.mxu0 0.0
    %1878 = vmatprep.subr.mxu0 0.0
    %1879 = vmatpush1.msra.mxu0 0.0
    %1880 = vmatprep.subr.mxu0 0.0
    %1881 = vmatpush1.msra.mxu0 0.0
    %1882 = vmatprep.subr.mxu0 0.0
    %1883 = vmatpush1.msra.mxu0 0.0
    %1884 = vmatprep.subr.mxu0 0.0
    %1885 = vmatpush1.msra.mxu0 0.0
    %1886 = vmatprep.subr.mxu0 0.0
    %1887 = vmatpush1.msra.mxu0 0.0
    %1888 = vmatprep.mubr.f32.mxu0 0.0
    %1889 = vmatmul.mubr.f32.gmra.mrb[0].mxu0 %v1792
    %v1890 = vpop.f32.mrb[0].mxu0
    %v1891 = vadd.f32 0.0, %v1890
    %v1892 = vpop.f32.mrb[0].mxu0
    %1893 = vmatprep.mubr.f32.mxu0 0.0
    %1894 = vmatmul.mubr.f32.gmra.mrb[0].mxu0 %v1793
    %v1895 = vpop.f32.mrb[0].mxu0
    %v1896 = vadd.f32 0.0, %v1895
    %v1897 = vpop.f32.mrb[0].mxu0
    %1898 = vmatprep.mubr.f32.mxu0 0.0
    %1899 = vmatmul.mubr.f32.gmra.mrb[0].mxu0 %v1794
    %v1900 = vpop.f32.mrb[0].mxu0
    %v1901 = vadd.f32 0.0, %v1900
    %v1902 = vpop.f32.mrb[0].mxu0
    %1903 = vmatprep.mubr.f32.mxu0 0.0
    %1904 = vmatmul.mubr.f32.gmra.mrb[0].mxu0 %v1795
    %v1905 = vpop.f32.mrb[0].mxu0
    %v1906 = vadd.f32 0.0, %v1905
    %v1907 = vpop.f32.mrb[0].mxu0
    %1908 = vmatprep.mubr.f32.mxu0 0.0
    %1909 = vmatmul.mubr.f32.gmra.mrb[0].mxu0 %v1796
    %v1910 = vpop.f32.mrb[0].mxu0
    %v1911 = vadd.f32 0.0, %v1910
    %v1912 = vpop.f32.mrb[0].mxu0
    %1913 = vmatprep.mubr.f32.mxu0 0.0
    %1914 = vmatmul.mubr.f32.gmra.mrb[0].mxu0 %v1797
    %v1915 = vpop.f32.mrb[0].mxu0
    %v1916 = vadd.f32 0.0, %v1915
    %v1917 = vpop.f32.mrb[0].mxu0
    %1918 = vmatprep.mubr.f32.mxu0 0.0
    %1919 = vmatmul.mubr.f32.gmra.mrb[0].mxu0 %v1798
    %v1920 = vpop.f32.mrb[0].mxu0
    %v1921 = vadd.f32 0.0, %v1920
    %v1922 = vpop.f32.mrb[0].mxu0
    %1923 = vmatprep.mubr.f32.mxu0 0.0
    %1924 = vmatmul.mubr.f32.gmra.mrb[0].mxu0 %v1799
    %v1925 = vpop.f32.mrb[0].mxu0
    %v1926 = vadd.f32 0.0, %v1925
    %v1927 = vpop.f32.mrb[0].mxu0
    %1928 = vmatprep.mubr.f32.mxu0 0.0
    %1929 = vmatmul.mubr.f32.gmra.mrb[0].mxu0 %v1800
    %v1930 = vpop.f32.mrb[0].mxu0
    %v1931 = vadd.f32 0.0, %v1930
    %v1932 = vpop.f32.mrb[0].mxu0
    %1933 = vmatprep.mubr.f32.mxu0 0.0
    %1934 = vmatmul.mubr.f32.gmra.mrb[0].mxu0 %v1801
    %v1935 = vpop.f32.mrb[0].mxu0
    %v1936 = vadd.f32 0.0, %v1935
    %v1937 = vpop.f32.mrb[0].mxu0
    %1938 = vmatprep.mubr.f32.mxu0 0.0
    %1939 = vmatmul.mubr.f32.gmra.mrb[0].mxu0 %v1802
    %v1940 = vpop.f32.mrb[0].mxu0
    %v1941 = vadd.f32 0.0, %v1940
    %v1942 = vpop.f32.mrb[0].mxu0
    %1943 = vmatprep.mubr.f32.mxu0 0.0
    %1944 = vmatmul.mubr.f32.gmra.mrb[0].mxu0 %v1803
    %v1945 = vpop.f32.mrb[0].mxu0
    %v1946 = vadd.f32 0.0, %v1945
    %v1947 = vpop.f32.mrb[0].mxu0
    %1948 = vmatprep.mubr.f32.mxu0 0.0
    %1949 = vmatmul.mubr.f32.gmra.mrb[0].mxu0 %v1804
    %v1950 = vpop.f32.mrb[0].mxu0
    %v1951 = vadd.f32 0.0, %v1950
    %v1952 = vpop.f32.mrb[0].mxu0
    %1953 = vmatprep.mubr.f32.mxu0 0.0
    %1954 = vmatmul.mubr.f32.gmra.mrb[0].mxu0 %v1805
    %v1955 = vpop.f32.mrb[0].mxu0
    %v1956 = vadd.f32 0.0, %v1955
    %v1957 = vpop.f32.mrb[0].mxu0
    %1958 = vmatprep.mubr.f32.mxu0 0.0
    %1959 = vmatmul.mubr.f32.gmra.mrb[0].mxu0 %v1806
    %v1960 = vpop.f32.mrb[0].mxu0
    %v1961 = vadd.f32 0.0, %v1960
    %v1962 = vpop.f32.mrb[0].mxu0
    %1963 = vmatprep.mubr.f32.mxu0 0.0
    %1964 = vmatmul.mubr.f32.gmra.mrb[0].mxu0 %v1807
    %v1965 = vpop.f32.mrb[0].mxu0
    %v1966 = vadd.f32 0.0, %v1965
    %v1967 = vpop.f32.mrb[0].mxu0
    %1968 = vdwg.mxu0
    %v1969 = vld [vmem:[#allocation16] sm:$0x1]
    %v1970 = vld [vmem:[#allocation17] sm:$0x1]
    %v1971 = vadd.f32 %v1891, %v1896
    %v1972 = vadd.f32 %v1971, %v1901
    %v1973 = vadd.f32 %v1972, %v1906
    %v1974 = vadd.f32 %v1973, %v1911
    %v1975 = vadd.f32 %v1974, %v1916
    %v1976 = vadd.f32 %v1975, %v1921
    %v1977 = vadd.f32 %v1976, %v1926
    %v1978 = vadd.f32 %v1977, %v1931
    %v1979 = vadd.f32 %v1978, %v1936
    %v1980 = vadd.f32 %v1979, %v1941
    %v1981 = vadd.f32 %v1980, %v1946
    %v1982 = vadd.f32 %v1981, %v1951
    %v1983 = vadd.f32 %v1982, %v1956
    %v1984 = vadd.f32 %v1983, %v1961
    %v1985 = vadd.f32 %v1984, %v1966
    %v1986 = vrot.slane %v1985, 4
    %v1987 = vadd.f32 %v1985, %v1986
    %v1988 = vrot.slane %v1987, 2
    %v1989 = vadd.f32 %v1987, %v1988
    %v1990 = vrot.slane %v1989, 1
    %v1991 = vadd.f32 %v1989, %v1990
    %v1992 = vmul.f32 %v1991, %v376
    %v1993 = vsub.f32 %v1891, %v1992
    %v1994 = vsub.f32 %v1896, %v1992
    %v1995 = vsub.f32 %v1901, %v1992
    %v1996 = vsub.f32 %v1906, %v1992
    %v1997 = vsub.f32 %v1911, %v1992
    %v1998 = vsub.f32 %v1916, %v1992
    %v1999 = vsub.f32 %v1921, %v1992
    %v2000 = vsub.f32 %v1926, %v1992
    %v2001 = vsub.f32 %v1931, %v1992
    %v2002 = vsub.f32 %v1936, %v1992
    %v2003 = vsub.f32 %v1941, %v1992
    %v2004 = vsub.f32 %v1946, %v1992
    %v2005 = vsub.f32 %v1951, %v1992
    %v2006 = vsub.f32 %v1956, %v1992
    %v2007 = vsub.f32 %v1961, %v1992
    %v2008 = vsub.f32 %v1966, %v1992
    %v2009 = vmul.f32 %v1993, %v1993
    %v2010 = vmul.f32 %v1994, %v1994
    %v2011 = vmul.f32 %v1995, %v1995
    %v2012 = vmul.f32 %v1996, %v1996
    %v2013 = vmul.f32 %v1997, %v1997
    %v2014 = vmul.f32 %v1998, %v1998
    %v2015 = vmul.f32 %v1999, %v1999
    %v2016 = vmul.f32 %v2000, %v2000
    %v2017 = vmul.f32 %v2001, %v2001
    %v2018 = vmul.f32 %v2002, %v2002
    %v2019 = vmul.f32 %v2003, %v2003
    %v2020 = vmul.f32 %v2004, %v2004
    %v2021 = vmul.f32 %v2005, %v2005
    %v2022 = vmul.f32 %v2006, %v2006
    %v2023 = vmul.f32 %v2007, %v2007
    %v2024 = vmul.f32 %v2008, %v2008
    %v2025 = vadd.f32 %v2009, %v2010
    %v2026 = vadd.f32 %v2025, %v2011
    %v2027 = vadd.f32 %v2026, %v2012
    %v2028 = vadd.f32 %v2027, %v2013
    %v2029 = vadd.f32 %v2028, %v2014
    %v2030 = vadd.f32 %v2029, %v2015
    %v2031 = vadd.f32 %v2030, %v2016
    %v2032 = vadd.f32 %v2031, %v2017
    %v2033 = vadd.f32 %v2032, %v2018
    %v2034 = vadd.f32 %v2033, %v2019
    %v2035 = vadd.f32 %v2034, %v2020
    %v2036 = vadd.f32 %v2035, %v2021
    %v2037 = vadd.f32 %v2036, %v2022
    %v2038 = vadd.f32 %v2037, %v2023
    %v2039 = vadd.f32 %v2038, %v2024
    %v2040 = vrot.slane %v2039, 4
    %v2041 = vadd.f32 %v2039, %v2040
    %v2042 = vrot.slane %v2041, 2
    %v2043 = vadd.f32 %v2041, %v2042
    %v2044 = vrot.slane %v2043, 1
    %v2045 = vadd.f32 %v2043, %v2044
    %v2046 = vmul.f32 %v2045, %v376
    %v2047 = vadd.f32 %v2046, 1e-05
    %v2048 = vrsqrt.pop %v2047
    %v2049 = vmul.f32 %v1969, %v2048
    %v2051 = vlaneseq
    %v2052 = vshrl.u32 %v2051, 7
    %v2053 = vsub.s32 0, %v2052
    %v2054 = vrot.slane %v2049, %v2053
    %v2056 = vmul.f32 %v1993, %v2054
    %v2057 = vmul.f32 %v1994, %v2054
    %v2058 = vmul.f32 %v1995, %v2054
    %v2059 = vmul.f32 %v1996, %v2054
    %v2060 = vmul.f32 %v1997, %v2054
    %v2061 = vmul.f32 %v1998, %v2054
    %v2062 = vmul.f32 %v1999, %v2054
    %v2063 = vmul.f32 %v2000, %v2054
    %v2064 = vmul.f32 %v2001, %v2054
    %v2065 = vmul.f32 %v2002, %v2054
    %v2066 = vmul.f32 %v2003, %v2054
    %v2067 = vmul.f32 %v2004, %v2054
    %v2068 = vmul.f32 %v2005, %v2054
    %v2069 = vmul.f32 %v2006, %v2054
    %v2070 = vmul.f32 %v2007, %v2054
    %v2071 = vmul.f32 %v2008, %v2054
    %v2073 = vlaneseq
    %v2074 = vshrl.u32 %v2073, 7
    %v2075 = vsub.s32 0, %v2074
    %v2076 = vrot.slane %v1970, %v2075
    %v2078 = vadd.f32 %v2056, %v2076
    %v2079 = vadd.f32 %v2057, %v2076
    %v2080 = vadd.f32 %v2058, %v2076
    %v2081 = vadd.f32 %v2059, %v2076
    %v2082 = vadd.f32 %v2060, %v2076
    %v2083 = vadd.f32 %v2061, %v2076
    %v2084 = vadd.f32 %v2062, %v2076
    %v2085 = vadd.f32 %v2063, %v2076
    %v2086 = vadd.f32 %v2064, %v2076
    %v2087 = vadd.f32 %v2065, %v2076
    %v2088 = vadd.f32 %v2066, %v2076
    %v2089 = vadd.f32 %v2067, %v2076
    %v2090 = vadd.f32 %v2068, %v2076
    %v2091 = vadd.f32 %v2069, %v2076
    %v2092 = vadd.f32 %v2070, %v2076
    %v2093 = vadd.f32 %v2071, %v2076
    %v2094 = vadd.f32 %v2078, %v2079
    %v2095 = vadd.f32 %v2094, %v2080
    %v2096 = vadd.f32 %v2095, %v2081
    %v2097 = vadd.f32 %v2096, %v2082
    %v2098 = vadd.f32 %v2097, %v2083
    %v2099 = vadd.f32 %v2098, %v2084
    %v2100 = vadd.f32 %v2099, %v2085
    %v2101 = vrot.slane %v2100, 4
    %v2102 = vadd.f32 %v2100, %v2101
    %v2103 = vrot.slane %v2102, 2
    %v2104 = vadd.f32 %v2102, %v2103
    %v2105 = vrot.slane %v2104, 1
    %v2106 = vadd.f32 %v2104, %v2105
    %v2107 = vadd.f32 %v2086, %v2087
    %v2108 = vadd.f32 %v2107, %v2088
    %v2109 = vadd.f32 %v2108, %v2089
    %v2110 = vadd.f32 %v2109, %v2090
    %v2111 = vadd.f32 %v2110, %v2091
    %v2112 = vadd.f32 %v2111, %v2092
    %v2113 = vadd.f32 %v2112, %v2093
    %v2114 = vrot.slane %v2113, 4
    %v2115 = vadd.f32 %v2113, %v2114
    %v2116 = vrot.slane %v2115, 2
    %v2117 = vadd.f32 %v2115, %v2116
    %v2118 = vrot.slane %v2117, 1
    %v2119 = vadd.f32 %v2117, %v2118
    %v2120 = vrcp.pop 64.0
    %v2121 = vmul.f32 %v2106, %v2120
    %v2122 = vmul.f32 %v2119, %v2120
    %v2123 = vld [vmem:[#allocation19] sm:$0xff]
    %v2124 = vld [vmem:[#allocation19 + $0x8] sm:$0xff]
    %v2125 = vld [vmem:[#allocation19 + $0x10] sm:$0xff]
    %v2126 = vld [vmem:[#allocation19 + $0x18] sm:$0xff]
    %v2127 = vld [vmem:[#allocation19 + $0x20] sm:$0xff]
    %v2128 = vld [vmem:[#allocation19 + $0x28] sm:$0xff]
    %v2129 = vld [vmem:[#allocation19 + $0x30] sm:$0xff]
    %v2130 = vld [vmem:[#allocation19 + $0x38] sm:$0xff]
    %v2131 = vld [vmem:[#allocation19 + $0x40] sm:$0xff]
    %v2132 = vld [vmem:[#allocation19 + $0x48] sm:$0xff]
    %v2133 = vld [vmem:[#allocation19 + $0x50] sm:$0xff]
    %v2134 = vld [vmem:[#allocation19 + $0x58] sm:$0xff]
    %v2135 = vld [vmem:[#allocation19 + $0x60] sm:$0xff]
    %v2136 = vld [vmem:[#allocation19 + $0x68] sm:$0xff]
    %v2137 = vld [vmem:[#allocation19 + $0x70] sm:$0xff]
    %v2138 = vld [vmem:[#allocation19 + $0x78] sm:$0xff]
    %vm2141 = vcmask 1041409
    %v2142 = vsel %vm2141, %v2122, %v2121
    %2144 = vmatprep.subr.mxu0 0.0
    %2145 = vmatpush1.msra.mxu0 %v2123
    %2146 = vmatprep.subr.mxu0 0.0
    %2147 = vmatpush1.msra.mxu0 %v2124
    %2148 = vmatprep.subr.mxu0 0.0
    %2149 = vmatpush1.msra.mxu0 %v2125
    %2150 = vmatprep.subr.mxu0 0.0
    %2151 = vmatpush1.msra.mxu0 %v2126
    %2152 = vmatprep.subr.mxu0 0.0
    %2153 = vmatpush1.msra.mxu0 %v2127
    %2154 = vmatprep.subr.mxu0 0.0
    %2155 = vmatpush1.msra.mxu0 %v2128
    %2156 = vmatprep.subr.mxu0 0.0
    %2157 = vmatpush1.msra.mxu0 %v2129
    %2158 = vmatprep.subr.mxu0 0.0
    %2159 = vmatpush1.msra.mxu0 %v2130
    %2160 = vmatprep.subr.mxu0 0.0
    %2161 = vmatpush1.msra.mxu0 %v2131
    %2162 = vmatprep.subr.mxu0 0.0
    %2163 = vmatpush1.msra.mxu0 %v2132
    %2164 = vmatprep.subr.mxu0 0.0
    %2165 = vmatpush1.msra.mxu0 %v2133
    %2166 = vmatprep.subr.mxu0 0.0
    %2167 = vmatpush1.msra.mxu0 %v2134
    %2168 = vmatprep.subr.mxu0 0.0
    %2169 = vmatpush1.msra.mxu0 %v2135
    %2170 = vmatprep.subr.mxu0 0.0
    %2171 = vmatpush1.msra.mxu0 %v2136
    %2172 = vmatprep.subr.mxu0 0.0
    %2173 = vmatpush1.msra.mxu0 %v2137
    %2174 = vmatprep.subr.mxu0 0.0
    %2175 = vmatpush1.msra.mxu0 %v2138
    %2176 = vmatprep.subr.mxu0 0.0
    %2177 = vmatpush1.msra.mxu0 0.0
    %2178 = vmatprep.subr.mxu0 0.0
    %2179 = vmatpush1.msra.mxu0 0.0
    %2180 = vmatprep.subr.mxu0 0.0
    %2181 = vmatpush1.msra.mxu0 0.0
    %2182 = vmatprep.subr.mxu0 0.0
    %2183 = vmatpush1.msra.mxu0 0.0
    %2184 = vmatprep.subr.mxu0 0.0
    %2185 = vmatpush1.msra.mxu0 0.0
    %2186 = vmatprep.subr.mxu0 0.0
    %2187 = vmatpush1.msra.mxu0 0.0
    %2188 = vmatprep.subr.mxu0 0.0
    %2189 = vmatpush1.msra.mxu0 0.0
    %2190 = vmatprep.subr.mxu0 0.0
    %2191 = vmatpush1.msra.mxu0 0.0
    %2192 = vmatprep.subr.mxu0 0.0
    %2193 = vmatpush1.msra.mxu0 0.0
    %2194 = vmatprep.subr.mxu0 0.0
    %2195 = vmatpush1.msra.mxu0 0.0
    %2196 = vmatprep.subr.mxu0 0.0
    %2197 = vmatpush1.msra.mxu0 0.0
    %2198 = vmatprep.subr.mxu0 0.0
    %2199 = vmatpush1.msra.mxu0 0.0
    %2200 = vmatprep.subr.mxu0 0.0
    %2201 = vmatpush1.msra.mxu0 0.0
    %2202 = vmatprep.subr.mxu0 0.0
    %2203 = vmatpush1.msra.mxu0 0.0
    %2204 = vmatprep.subr.mxu0 0.0
    %2205 = vmatpush1.msra.mxu0 0.0
    %2206 = vmatprep.subr.mxu0 0.0
    %2207 = vmatpush1.msra.mxu0 0.0
    %2208 = vmatprep.mubr.f32.mxu0 0.0
    %2209 = vmatmul.mubr.f32.gmra.mrb[0].mxu0 %v2142
    %v2210 = vpop.f32.mrb[0].mxu0
    %v2211 = vadd.f32 0.0, %v2210
    %v2212 = vpop.f32.mrb[0].mxu0
    %2213 = vdwg.mxu0
    %v2214 = vxor.u32 %v2211, 2147483648
    %v2215 = vmul.f32 %v2214, 1.442695
    %v2216 = vpow.pop %v2215
    %v2217 = vadd.f32 %v2216, 1.0
    %v2218 = vrcp.pop %v2217
    %v2219 = vmul.f32 1.0, %v2218
    %v2222 = vunpack.c.l.s4 1966171168
    %v2223 = vunpack.c.0.s8 %v2222
    %v2224 = vlaneseq
    %v2225 = vshrl.u32 %v2224, 7
    %v2226 = vsub.s32 %v2223, %v2225
    %v2227 = vrot.slane %v2219, %v2226
    %v2228 = vcombine.high %v2227, %v2227
    %v2230 = vunpack.c.l.s4 1966171168
    %v2231 = vunpack.c.0.s8 %v2230
    %v2232 = vlaneseq
    %v2233 = vshrl.u32 %v2232, 7
    %v2234 = vsub.s32 %v2231, %v2233
    %v2235 = vrot.slane %v2227, %v2234
    %v2237 = vunpack.c.l.s4 1966171168
    %v2238 = vunpack.c.0.s8 %v2237
    %v2239 = vlaneseq
    %v2240 = vshrl.u32 %v2239, 7
    %v2241 = vsub.s32 %v2238, %v2240
    %v2242 = vrot.slane %v2228, %v2241
    %v2243 = vlaneseq
    %v2244 = vshrl.u32 %v2243, 7
    %v2245 = vsub.s32 0, %v2244
    %v2246 = vrot.slane %v2235, %v2245
    %v2247 = vlaneseq
    %v2248 = vshrl.u32 %v2247, 7
    %v2249 = vsub.s32 0, %v2248
    %v2250 = vrot.slane %v2242, %v2249
    %v2253 = vmul.f32 %v2078, %v2246
    %v2254 = vmul.f32 %v2079, %v2246
    %v2255 = vmul.f32 %v2080, %v2246
    %v2256 = vmul.f32 %v2081, %v2246
    %v2257 = vmul.f32 %v2082, %v2246
    %v2258 = vmul.f32 %v2083, %v2246
    %v2259 = vmul.f32 %v2084, %v2246
    %v2260 = vmul.f32 %v2085, %v2246
    %v2261 = vmul.f32 %v2086, %v2250
    %v2262 = vmul.f32 %v2087, %v2250
    %v2263 = vmul.f32 %v2088, %v2250
    %v2264 = vmul.f32 %v2089, %v2250
    %v2265 = vmul.f32 %v2090, %v2250
    %v2266 = vmul.f32 %v2091, %v2250
    %v2267 = vmul.f32 %v2092, %v2250
    %v2268 = vmul.f32 %v2093, %v2250
    %v2269 = vadd.f32 %v2253, %v176
    %v2270 = vadd.f32 %v2254, %v177
    %v2271 = vadd.f32 %v2255, %v178
    %v2272 = vadd.f32 %v2256, %v179
    %v2273 = vadd.f32 %v2257, %v180
    %v2274 = vadd.f32 %v2258, %v181
    %v2275 = vadd.f32 %v2259, %v182
    %v2276 = vadd.f32 %v2260, %v183
    %v2277 = vadd.f32 %v2261, %v184
    %v2278 = vadd.f32 %v2262, %v185
    %v2279 = vadd.f32 %v2263, %v186
    %v2280 = vadd.f32 %v2264, %v187
    %v2281 = vadd.f32 %v2265, %v188
    %v2282 = vadd.f32 %v2266, %v189
    %v2283 = vadd.f32 %v2267, %v190
    %v2284 = vadd.f32 %v2268, %v191
    %v2285 = vmax.f32 %v2269, 0.0
    %v2286 = vmax.f32 %v2270, 0.0
    %v2287 = vmax.f32 %v2271, 0.0
    %v2288 = vmax.f32 %v2272, 0.0
    %v2289 = vmax.f32 %v2273, 0.0
    %v2290 = vmax.f32 %v2274, 0.0
    %v2291 = vmax.f32 %v2275, 0.0
    %v2292 = vmax.f32 %v2276, 0.0
    %v2293 = vmax.f32 %v2277, 0.0
    %v2294 = vmax.f32 %v2278, 0.0
    %v2295 = vmax.f32 %v2279, 0.0
    %v2296 = vmax.f32 %v2280, 0.0
    %v2297 = vmax.f32 %v2281, 0.0
    %v2298 = vmax.f32 %v2282, 0.0
    %v2299 = vmax.f32 %v2283, 0.0
    %v2300 = vmax.f32 %v2284, 0.0
    %2301 = vst [vmem:[#allocation20] sm:$0xff] %v2285
    %2302 = vst [vmem:[#allocation20 + $0x8] sm:$0xff] %v2286
    %2303 = vst [vmem:[#allocation20 + $0x10] sm:$0xff] %v2287
    %2304 = vst [vmem:[#allocation20 + $0x18] sm:$0xff] %v2288
    %2305 = vst [vmem:[#allocation20 + $0x20] sm:$0xff] %v2289
    %2306 = vst [vmem:[#allocation20 + $0x28] sm:$0xff] %v2290
    %2307 = vst [vmem:[#allocation20 + $0x30] sm:$0xff] %v2291
    %2308 = vst [vmem:[#allocation20 + $0x38] sm:$0xff] %v2292
    %2309 = vst [vmem:[#allocation20 + $0x40] sm:$0xff] %v2293
    %2310 = vst [vmem:[#allocation20 + $0x48] sm:$0xff] %v2294
    %2311 = vst [vmem:[#allocation20 + $0x50] sm:$0xff] %v2295
    %2312 = vst [vmem:[#allocation20 + $0x58] sm:$0xff] %v2296
    %2313 = vst [vmem:[#allocation20 + $0x60] sm:$0xff] %v2297
    %2314 = vst [vmem:[#allocation20 + $0x68] sm:$0xff] %v2298
    %2315 = vst [vmem:[#allocation20 + $0x70] sm:$0xff] %v2299
    %2316 = vst [vmem:[#allocation20 + $0x78] sm:$0xff] %v2300
    // Predicated region
    $region90: #{tpu_custom_call.1} parent=1 // pred_check
      _
    $region91: #{tpu_custom_call.1} parent=1 // pred_check_branch
      %2318 = sbr.rel (0) target = $region93
    $region92: #{tpu_custom_call.1} parent=1 // pred_region
      %s2320 = ssub.s32 2048, 2048
      %2321 = vsyncadd [#allocation4], %s2320
      %s2322 = sshll.u32 [#allocation20], 4
      %s2323 = int_to_ptr.vmem [resolvable:$true] %s2322
      %2328 = dma.vmem_to_hbm [thread:$0]  %s2323, 2048, %s11, [#allocation4], 128, 128, 8
    $region93: #{tpu_custom_call.1} parent=1 // pred_fallthru
      _
    // Predicated region
    $region94: #{tpu_custom_call.1} parent=1 // pred_check
      _
    $region95: #{tpu_custom_call.1} parent=1 // pred_check_branch
      %2330 = sbr.rel (0) target = $region97
    $region96: #{tpu_custom_call.1} parent=1 // pred_region
      %2331 = dma.done [#allocation4], 2048
    $region97: #{tpu_custom_call.1} parent=1 // pred_fallthru
      _
    %2332 = vsyncpa [#allocation3], 1
    %2333 = vsyncpa [#allocation6], 1
    %2334 = vsyncpa [#allocation9], 1
    %2335 = vsyncpa [#allocation12], 1
    %2336 = vsyncpa [#allocation15], 1
    %2337 = vsyncpa [#allocation18], 1
    %2338 = vsyncpa [#allocation4], 1

</llo_original>
